<compile_context>
chip_gen: v7x
topology: tpu7x:2x2x1
jax: 0.10.0
libtpu: 0.0.40
codegen_flags: <defaults>
</compile_context>

<pallas_src>
import functools

import numpy as np

import jax
import jax.numpy as jnp
from jax import lax
from jax.experimental import pallas as pl
from jax.experimental.pallas import tpu as pltpu


# --------------------------------------------------------------------------- #
# Generation-aware helpers
# --------------------------------------------------------------------------- #
def _min_parallel_steps():
    """v7x has 2 TensorCores per chip (megacore) -> give each TC >= 1 grid step.
    v5e / v6e have a single TC, where extra grid steps are pure overhead."""
    try:
        kind = (jax.devices()[0].device_kind or "").lower()
    except Exception:
        return 1
    return 2 if ("v7" in kind or "7x" in kind) else 1


def _choose_depth_block(N, D, HW, *, row_target=4096, unroll_cap=16):
    """Pick the depth block size Dblk (a divisor of D).

    Large blocks (rows = Dblk*HW up to ~4096) keep per-grid-step overhead small;
    the number of grid steps N*(D//Dblk) is kept >= 2 only on chips with 2 TCs."""
    min_steps = _min_parallel_steps()
    cands = [d for d in range(1, D + 1)
             if D % d == 0 and d <= unroll_cap and d * HW <= row_target]
    if not cands:
        cands = [1]
    with_steps = [d for d in cands if N * (D // d) >= min_steps]
    pool = with_steps if with_steps else cands
    dblk = max(pool)
    return dblk, D // dblk


# --------------------------------------------------------------------------- #
# Weight packing for the sub-pixel fast path (done ONCE, outside the hot path)
# --------------------------------------------------------------------------- #
def pack_deconv_weights(weight, bias, *, kernel_size, stride, padding,
                        compute_dtype=jnp.bfloat16):
    """Pack ConvTranspose3d weights into (Wwin, Wwin^2*Cin, s^3*Cout) for the
    fused sub-pixel GEMM.  bf16 operands; accumulation stays f32 in-kernel."""
    K, s, p = kernel_size, stride, padding
    assert K % s == 0 and K - 2 * p == s and 0 <= p < s, "fast-path config only"
    Cin, Cout = weight.shape[0], weight.shape[1]
    J = K // s                 # kernel taps per phase per spatial dim
    Wwin = J + 1               # shared im2col window per spatial dim
    Lp = J - 1                 # left pad of the input

    # Static one-hot selector: S[w, r, k] = 1 iff phase r uses kernel index k at
    # window offset w (validated against the lax.conv reference).
    S = np.zeros((Wwin, s, K), np.float32)
    for r in range(s):
        for j in range(J):
            S[Lp + (r + p) // s - j, r, s * j + (r + p) % s] = 1.0
    S = jnp.asarray(S, dtype=weight.dtype)

    # (wd, wh, ww, cin) x (rd, rh, rw, cout); keep wd as a separate leading axis so
    # the kernel can accumulate Wwin depth-shifted dots over a halo'd VMEM slab.
    w8 = jnp.einsum('apk,bql,crm,ioklm->abcipqro', S, S, S, weight)
    w_pack = w8.reshape(Wwin, Wwin * Wwin * Cin, s ** 3 * Cout).astype(compute_dtype)
    b_pack = jnp.tile(bias, s ** 3).reshape(1, s ** 3 * Cout).astype(jnp.float32)
    return w_pack, b_pack


# --------------------------------------------------------------------------- #
# Fast path: fused, halo'd sub-pixel deconvolution kernel
# --------------------------------------------------------------------------- #
def deconv_subpixel_apply(x, w_pack, b_pack, *, kernel_size, stride, padding):
    """x: (N, Cin, D, H, W) f32 -> (N, Cout, sD, sH, sW) f32."""
    K, s, p = kernel_size, stride, padding
    N, Cin, D, H, W = x.shape
    J = K // s
    Wwin = J + 1
    Lp = J - 1
    HW = H * W
    KHW = Wwin * Wwin * Cin            # inner contraction width per depth tap
    NPACK = w_pack.shape[-1]           # s^3 * Cout  (= 128 for s=2, Cout=16)
    Cout = NPACK // (s ** 3)
    compute_dtype = w_pack.dtype

    # ---- cheap wrapper prep: channels-last, pad, (wh, ww) window pack (bf16) ----
    x_l = jnp.transpose(x, (0, 2, 3, 4, 1))                     # (N, D, H, W, Cin)
    x_pad = jnp.pad(x_l, ((0, 0), (Lp, 1), (Lp, 1), (Lp, 1), (0, 0)))
    Dp = D + Wwin - 1
    pieces = [x_pad[:, :, wh:wh + H, ww:ww + W, :]
              for wh in range(Wwin) for ww in range(Wwin)]
    x_hw = jnp.stack(pieces, axis=-2).reshape(N, Dp, HW, KHW).astype(compute_dtype)

    # ---- depth blocking with a Wwin-1 halo shared between neighbouring blocks ----
    Dblk, nD = _choose_depth_block(N, D, HW)
    Dh = Dblk + Wwin - 1
    if nD == 1:
        x_blk = x_hw.reshape(N, Dh, HW, KHW)
    else:
        x_blk = jnp.stack(
            [x_hw[:, t * Dblk: t * Dblk + Dh] for t in range(nD)], axis=1
        ).reshape(N * nD, Dh, HW, KHW)

    def kernel(x_ref, w_ref, b_ref, o_ref):
        # x_ref: (Dh, HW, KHW) bf16      w_ref: (Wwin, KHW, NPACK) bf16
        # b_ref: (1, NPACK)    f32       o_ref: (Dblk, HW, NPACK)  f32
        for d in range(Dblk):                       # static unroll (Dblk <= 16)
            acc = jnp.dot(x_ref[d], w_ref[0],
                          preferred_element_type=jnp.float32)
            for wd in range(1, Wwin):               # fused depth-window taps
                acc = acc + jnp.dot(x_ref[d + wd], w_ref[wd],
                                    preferred_element_type=jnp.float32)
            o_ref[d] = acc + b_ref[...]

    # Right-sized VMEM budget: real double-buffered footprint + headroom
    # (matters most on v7x, which only has 64 MiB VMEM per TensorCore).
    itemsize = jnp.dtype(compute_dtype).itemsize
    vmem_bytes = (2 * Dh * HW * KHW * itemsize          # x block (double-buffered)
                  + 2 * Dblk * HW * NPACK * 4           # out block (double-buffered)
                  + 2 * Wwin * KHW * NPACK * itemsize   # packed weights
                  + 2 * NPACK * 4                       # bias
                  + (4 << 20))                          # compiler scratch headroom
    vmem_bytes = int(min(max(vmem_bytes, 8 << 20), 96 << 20))

    out = pl.pallas_call(
        kernel,
        out_shape=jax.ShapeDtypeStruct((N * nD, Dblk, HW, NPACK), jnp.float32),
        grid_spec=pltpu.PrefetchScalarGridSpec(
            num_scalar_prefetch=0,
            grid=(N * nD,),
            in_specs=[
                pl.BlockSpec((None, Dh, HW, KHW), lambda i: (i, 0, 0, 0)),
                # Grid-invariant operands: constant index_map -> fetched once
                # (extra double-buffer is only ~tens of KB, so pl.Buffered(1)
                #  is not worth the risk/complexity here).
                pl.BlockSpec((Wwin, KHW, NPACK), lambda i: (0, 0, 0)),
                pl.BlockSpec((1, NPACK), lambda i: (0, 0)),
            ],
            out_specs=pl.BlockSpec((None, Dblk, HW, NPACK),
                                   lambda i: (i, 0, 0, 0)),
        ),
        compiler_params=pltpu.CompilerParams(
            dimension_semantics=("parallel",),
            vmem_limit_bytes=vmem_bytes,
        ),
    )(x_blk, w_pack, b_pack)

    # Pixel shuffle: interleave the s^3 phases into NCDHW.  This is the only
    # remaining full pass over the 8x-upsampled output.
    # TODO(synk): if the consumer accepts channels-last (N, sD, sH, sW, Cout),
    # this transpose (a full HBM read+write of the output) can be skipped.
    y = out.reshape(N, D, H, W, s, s, s, Cout)
    y = jnp.transpose(y, (0, 7, 1, 4, 2, 5, 3, 6))   # (N, Cout, D, sd, H, sh, W, sw)
    return y.reshape(N, Cout, s * D, s * H, s * W)


# --------------------------------------------------------------------------- #
# Plain Pallas GEMM + bias (used only by the general fallback path)
# --------------------------------------------------------------------------- #
def _gemm_bias_kernel(x_ref, w_ref, b_ref, o_ref):
    acc = jnp.dot(x_ref[...], w_ref[...], preferred_element_type=jnp.float32)
    o_ref[...] = (acc + b_ref[...]).astype(o_ref.dtype)


def _gemm_bias(x_col, w_col, bias, *, tm_max=4096):
    """y[m, co] = sum_k x_col[m, k] * w_col[k, co] + bias[co]."""
    M, Kc = x_col.shape
    Co = w_col.shape[1]

    # No K padding: the last block dim equals the full array dim, which is exempt
    # from the 128-divisibility rule, so we avoid an extra HBM pad copy.
    min_tiles = _min_parallel_steps()
    budget = 24 * 1024 * 1024 - (Kc * Co + Co) * 8      # leave weights/bias room
    tm_cap = max(8, min(tm_max, budget // (8 * (Kc + Co))))
    tm_cap = max(8, (tm_cap // 8) * 8)
    tiles = max(min_tiles, -(-M // tm_cap))
    tm = ((-(-M // tiles) + 7) // 8) * 8
    M_pad = tm * tiles
    if M_pad != M:
        x_col = jnp.pad(x_col, ((0, M_pad - M), (0, 0)))

    vmem = 2 * tm * (Kc + Co) * 4 + 2 * (Kc * Co + Co) * 4 + (4 << 20)
    out = pl.pallas_call(
        _gemm_bias_kernel,
        out_shape=jax.ShapeDtypeStruct((M_pad, Co), jnp.float32),
        grid_spec=pltpu.PrefetchScalarGridSpec(
            num_scalar_prefetch=0,
            grid=(tiles,),
            in_specs=[
                pl.BlockSpec((tm, Kc), lambda i: (i, 0)),
                pl.BlockSpec((Kc, Co), lambda i: (0, 0)),
                pl.BlockSpec((1, Co), lambda i: (0, 0)),
            ],
            out_specs=pl.BlockSpec((tm, Co), lambda i: (i, 0)),
        ),
        compiler_params=pltpu.CompilerParams(
            dimension_semantics=("parallel",),
            vmem_limit_bytes=int(min(max(vmem, 8 << 20), 96 << 20)),
        ),
    )(x_col, w_col, bias.reshape(1, Co))
    return out if M_pad == M else out[:M]


# --------------------------------------------------------------------------- #
# General fallback: zero-stuff + K^3 im2col GEMM (only for unsupported configs)
# --------------------------------------------------------------------------- #
def _deconv_zero_stuff(x, weight, bias, K, s, p):
    N, Cin, D, H, W = x.shape
    Cout = weight.shape[1]
    Do = s * (D - 1) + K - 2 * p
    Ho = s * (H - 1) + K - 2 * p
    Wo = s * (W - 1) + K - 2 * p
    pad = K - 1 - p
    assert pad >= 0

    x_l = jnp.transpose(x, (0, 2, 3, 4, 1))
    x_dil = jnp.zeros((N, s * (D - 1) + 1, s * (H - 1) + 1, s * (W - 1) + 1, Cin),
                      x.dtype)
    x_dil = x_dil.at[:, ::s, ::s, ::s, :].set(x_l)
    x_up = jnp.pad(x_dil, ((0, 0), (pad, pad), (pad, pad), (pad, pad), (0, 0)))

    patches = []
    for kd in range(K):
        for kh in range(K):
            for kw in range(K):
                patches.append(x_up[:, kd:kd + Do, kh:kh + Ho, kw:kw + Wo, :])
    x_col = jnp.stack(patches, axis=-2).reshape(N * Do * Ho * Wo, K * K * K * Cin)

    w_flip = jnp.flip(weight, axis=(2, 3, 4))
    w_col = jnp.transpose(w_flip, (2, 3, 4, 0, 1)).reshape(K * K * K * Cin, Cout)

    y = _gemm_bias(x_col, w_col, bias)
    y = y.reshape(N, Do, Ho, Wo, Cout)
    return jnp.transpose(y, (0, 4, 1, 2, 3))


def deconvolution_forward(x, weight, bias, *, kernel_size, stride, padding):
    """PyTorch ConvTranspose3d semantics (NCDHW in / NCDHW out)."""
    K, s, p = kernel_size, stride, padding
    if K % s == 0 and K - 2 * p == s and 0 <= p < s:
        w_pack, b_pack = pack_deconv_weights(
            weight, bias, kernel_size=K, stride=s, padding=p)
        return deconv_subpixel_apply(
            x, w_pack, b_pack, kernel_size=K, stride=s, padding=p)
    # TODO(synk): general (K, s, p) configs use the slower zero-stuffed im2col path.
    return _deconv_zero_stuff(x, weight, bias, K, s, p)


def _reference(x, weight, bias, *, kernel_size, stride, padding):
    """Independent JAX reference: transposed conv == lhs-dilated conv with a
    spatially flipped kernel and swapped channel axes (PyTorch semantics)."""
    K, s, p = kernel_size, stride, padding
    rhs = jnp.transpose(jnp.flip(weight, axis=(2, 3, 4)), (1, 0, 2, 3, 4))
    y = lax.conv_general_dilated(
        x, rhs, window_strides=(1, 1, 1),
        padding=[(K - 1 - p, K - 1 - p)] * 3,
        lhs_dilation=(s, s, s),
        dimension_numbers=('NCDHW', 'OIDHW', 'NCDHW'))
    return y + bias[None, :, None, None, None]


if __name__ == "__main__":
    # Module hyper-params: Deconvolution(in_channels=4, kernel_size=4, stride=2)
    in_channels = 4
    out_channels = 16          # fixed by the module definition
    kernel_size = 4
    stride = 2
    padding = 1                # fixed by the module definition

    N, D, H, W = 2, 4, 6, 8    # small NCDHW input

    key = jax.random.PRNGKey(0)
    kx, kw, kb = jax.random.split(key, 3)
    x = jax.random.normal(kx, (N, in_channels, D, H, W), dtype=jnp.float32)
    fan = in_channels * kernel_size ** 3
    weight = jax.random.normal(
        kw, (in_channels, out_channels, kernel_size, kernel_size, kernel_size),
        dtype=jnp.float32) / jnp.sqrt(fan)
    bias = jax.random.normal(kb, (out_channels,), dtype=jnp.float32) * 0.01

    # Pack the (constant) deconv weights once, outside the hot jitted call.
    w_pack, b_pack = pack_deconv_weights(
        weight, bias, kernel_size=kernel_size, stride=stride, padding=padding)

    fwd = jax.jit(functools.partial(deconv_subpixel_apply,
                                    kernel_size=kernel_size,
                                    stride=stride,
                                    padding=padding))
    y = fwd(x, w_pack, b_pack)
    jax.block_until_ready(y)

    Do = stride * (D - 1) + kernel_size - 2 * padding
    Ho = stride * (H - 1) + kernel_size - 2 * padding
    Wo = stride * (W - 1) + kernel_size - 2 * padding
    assert y.shape == (N, out_channels, Do, Ho, Wo), y.shape

    # bf16 GEMM operands with f32 accumulation: relax tolerance vs the f32 reference.
    y_ref = _reference(x, weight, bias, kernel_size=kernel_size,
                       stride=stride, padding=padding)
    assert jnp.allclose(y, y_ref, atol=2e-2, rtol=2e-2)

    print("KERNEL_OK")
</pallas_src>

<mosaic_0001>
module attributes {stable_mosaic.version = 11 : i64} {
  func.func @kernel(%arg0: i32, %arg1: memref<1x6x48x36xbf16, #tpu.memory_space<vmem>>, %arg2: memref<3x36x128xbf16, #tpu.memory_space<vmem>>, %arg3: memref<1x128xf32, #tpu.memory_space<vmem>>, %arg4: memref<1x4x48x128xf32, #tpu.memory_space<vmem>>) attributes {dimension_semantics = [#tpu.dimension_semantics<parallel>], iteration_bounds = array<i64: 2>, scalar_prefetch = 0 : i64, scratch_operands = 0 : i64, tpu.core_type = #tpu.core_type<tc>, window_params = [{transform_indices = @transform_0, window_bounds = array<i64: 1, 6, 48, 36>}, {pipeline_mode = #tpu.pipeline_mode<synchronous>, transform_indices = @transform_1, window_bounds = array<i64: 3, 36, 128>}, {pipeline_mode = #tpu.pipeline_mode<synchronous>, transform_indices = @transform_2, window_bounds = array<i64: 1, 128>}, {transform_indices = @transform_3, window_bounds = array<i64: 1, 4, 48, 128>}]} {
    %c0 = arith.constant 0 : index
    %c0_0 = arith.constant 0 : index
    %c0_1 = arith.constant 0 : index
    %c0_2 = arith.constant 0 : index
    %0 = vector.load %arg1[%c0, %c0_0, %c0_1, %c0_2] : memref<1x6x48x36xbf16, #tpu.memory_space<vmem>>, vector<1x1x48x36xbf16>
    %1 = vector.shape_cast %0 : vector<1x1x48x36xbf16> to vector<48x36xbf16>
    %c0_3 = arith.constant 0 : index
    %c0_4 = arith.constant 0 : index
    %c0_5 = arith.constant 0 : index
    %2 = vector.load %arg2[%c0_3, %c0_4, %c0_5] : memref<3x36x128xbf16, #tpu.memory_space<vmem>>, vector<1x36x128xbf16>
    %3 = vector.shape_cast %2 : vector<1x36x128xbf16> to vector<36x128xbf16>
    %cst = arith.constant dense<0.000000e+00> : vector<48x128xf32>
    %4 = tpu.matmul %1, %3, %cst {dimension_numbers = #tpu.dot_dimension_numbers<[1], [0], [0], [1], [0, 0, 1, 1], [], []>} : vector<48x36xbf16>, vector<36x128xbf16>, vector<48x128xf32> -> vector<48x128xf32>
    %c0_6 = arith.constant 0 : index
    %c1 = arith.constant 1 : index
    %c0_7 = arith.constant 0 : index
    %c0_8 = arith.constant 0 : index
    %5 = vector.load %arg1[%c0_6, %c1, %c0_7, %c0_8] : memref<1x6x48x36xbf16, #tpu.memory_space<vmem>>, vector<1x1x48x36xbf16>
    %6 = vector.shape_cast %5 : vector<1x1x48x36xbf16> to vector<48x36xbf16>
    %c1_9 = arith.constant 1 : index
    %c0_10 = arith.constant 0 : index
    %c0_11 = arith.constant 0 : index
    %7 = vector.load %arg2[%c1_9, %c0_10, %c0_11] : memref<3x36x128xbf16, #tpu.memory_space<vmem>>, vector<1x36x128xbf16>
    %8 = vector.shape_cast %7 : vector<1x36x128xbf16> to vector<36x128xbf16>
    %cst_12 = arith.constant dense<0.000000e+00> : vector<48x128xf32>
    %9 = tpu.matmul %6, %8, %cst_12 {dimension_numbers = #tpu.dot_dimension_numbers<[1], [0], [0], [1], [0, 0, 1, 1], [], []>} : vector<48x36xbf16>, vector<36x128xbf16>, vector<48x128xf32> -> vector<48x128xf32>
    %10 = arith.addf %4, %9 : vector<48x128xf32>
    %c0_13 = arith.constant 0 : index
    %c2 = arith.constant 2 : index
    %c0_14 = arith.constant 0 : index
    %c0_15 = arith.constant 0 : index
    %11 = vector.load %arg1[%c0_13, %c2, %c0_14, %c0_15] : memref<1x6x48x36xbf16, #tpu.memory_space<vmem>>, vector<1x1x48x36xbf16>
    %12 = vector.shape_cast %11 : vector<1x1x48x36xbf16> to vector<48x36xbf16>
    %c2_16 = arith.constant 2 : index
    %c0_17 = arith.constant 0 : index
    %c0_18 = arith.constant 0 : index
    %13 = vector.load %arg2[%c2_16, %c0_17, %c0_18] : memref<3x36x128xbf16, #tpu.memory_space<vmem>>, vector<1x36x128xbf16>
    %14 = vector.shape_cast %13 : vector<1x36x128xbf16> to vector<36x128xbf16>
    %cst_19 = arith.constant dense<0.000000e+00> : vector<48x128xf32>
    %15 = tpu.matmul %12, %14, %cst_19 {dimension_numbers = #tpu.dot_dimension_numbers<[1], [0], [0], [1], [0, 0, 1, 1], [], []>} : vector<48x36xbf16>, vector<36x128xbf16>, vector<48x128xf32> -> vector<48x128xf32>
    %16 = arith.addf %10, %15 : vector<48x128xf32>
    %c0_20 = arith.constant 0 : index
    %c0_21 = arith.constant 0 : index
    %17 = vector.load %arg3[%c0_20, %c0_21] : memref<1x128xf32, #tpu.memory_space<vmem>>, vector<1x128xf32>
    %18 = vector.broadcast %17 : vector<1x128xf32> to vector<48x128xf32>
    %19 = arith.addf %16, %18 : vector<48x128xf32>
    %c0_22 = arith.constant 0 : index
    %c0_23 = arith.constant 0 : index
    %c0_24 = arith.constant 0 : index
    %c0_25 = arith.constant 0 : index
    %20 = vector.load %arg4[%c0_22, %c0_23, %c0_24, %c0_25] : memref<1x4x48x128xf32, #tpu.memory_space<vmem>>, vector<1x1x48x128xf32>
    %21 = vector.shape_cast %20 : vector<1x1x48x128xf32> to vector<48x128xf32>
    %22 = vector.shape_cast %19 : vector<48x128xf32> to vector<1x1x48x128xf32>
    tpu.vector_store %arg4[%c0_22, %c0_23, %c0_24, %c0_25], %22 {strides = array<i32>} : memref<1x4x48x128xf32, #tpu.memory_space<vmem>>, vector<1x1x48x128xf32>,
    %c0_26 = arith.constant 0 : index
    %c1_27 = arith.constant 1 : index
    %c0_28 = arith.constant 0 : index
    %c0_29 = arith.constant 0 : index
    %23 = vector.load %arg1[%c0_26, %c1_27, %c0_28, %c0_29] : memref<1x6x48x36xbf16, #tpu.memory_space<vmem>>, vector<1x1x48x36xbf16>
    %24 = vector.shape_cast %23 : vector<1x1x48x36xbf16> to vector<48x36xbf16>
    %c0_30 = arith.constant 0 : index
    %c0_31 = arith.constant 0 : index
    %c0_32 = arith.constant 0 : index
    %25 = vector.load %arg2[%c0_30, %c0_31, %c0_32] : memref<3x36x128xbf16, #tpu.memory_space<vmem>>, vector<1x36x128xbf16>
    %26 = vector.shape_cast %25 : vector<1x36x128xbf16> to vector<36x128xbf16>
    %cst_33 = arith.constant dense<0.000000e+00> : vector<48x128xf32>
    %27 = tpu.matmul %24, %26, %cst_33 {dimension_numbers = #tpu.dot_dimension_numbers<[1], [0], [0], [1], [0, 0, 1, 1], [], []>} : vector<48x36xbf16>, vector<36x128xbf16>, vector<48x128xf32> -> vector<48x128xf32>
    %c0_34 = arith.constant 0 : index
    %c2_35 = arith.constant 2 : index
    %c0_36 = arith.constant 0 : index
    %c0_37 = arith.constant 0 : index
    %28 = vector.load %arg1[%c0_34, %c2_35, %c0_36, %c0_37] : memref<1x6x48x36xbf16, #tpu.memory_space<vmem>>, vector<1x1x48x36xbf16>
    %29 = vector.shape_cast %28 : vector<1x1x48x36xbf16> to vector<48x36xbf16>
    %c1_38 = arith.constant 1 : index
    %c0_39 = arith.constant 0 : index
    %c0_40 = arith.constant 0 : index
    %30 = vector.load %arg2[%c1_38, %c0_39, %c0_40] : memref<3x36x128xbf16, #tpu.memory_space<vmem>>, vector<1x36x128xbf16>
    %31 = vector.shape_cast %30 : vector<1x36x128xbf16> to vector<36x128xbf16>
    %cst_41 = arith.constant dense<0.000000e+00> : vector<48x128xf32>
    %32 = tpu.matmul %29, %31, %cst_41 {dimension_numbers = #tpu.dot_dimension_numbers<[1], [0], [0], [1], [0, 0, 1, 1], [], []>} : vector<48x36xbf16>, vector<36x128xbf16>, vector<48x128xf32> -> vector<48x128xf32>
    %33 = arith.addf %27, %32 : vector<48x128xf32>
    %c0_42 = arith.constant 0 : index
    %c3 = arith.constant 3 : index
    %c0_43 = arith.constant 0 : index
    %c0_44 = arith.constant 0 : index
    %34 = vector.load %arg1[%c0_42, %c3, %c0_43, %c0_44] : memref<1x6x48x36xbf16, #tpu.memory_space<vmem>>, vector<1x1x48x36xbf16>
    %35 = vector.shape_cast %34 : vector<1x1x48x36xbf16> to vector<48x36xbf16>
    %c2_45 = arith.constant 2 : index
    %c0_46 = arith.constant 0 : index
    %c0_47 = arith.constant 0 : index
    %36 = vector.load %arg2[%c2_45, %c0_46, %c0_47] : memref<3x36x128xbf16, #tpu.memory_space<vmem>>, vector<1x36x128xbf16>
    %37 = vector.shape_cast %36 : vector<1x36x128xbf16> to vector<36x128xbf16>
    %cst_48 = arith.constant dense<0.000000e+00> : vector<48x128xf32>
    %38 = tpu.matmul %35, %37, %cst_48 {dimension_numbers = #tpu.dot_dimension_numbers<[1], [0], [0], [1], [0, 0, 1, 1], [], []>} : vector<48x36xbf16>, vector<36x128xbf16>, vector<48x128xf32> -> vector<48x128xf32>
    %39 = arith.addf %33, %38 : vector<48x128xf32>
    %c0_49 = arith.constant 0 : index
    %c0_50 = arith.constant 0 : index
    %40 = vector.load %arg3[%c0_49, %c0_50] : memref<1x128xf32, #tpu.memory_space<vmem>>, vector<1x128xf32>
    %41 = vector.broadcast %40 : vector<1x128xf32> to vector<48x128xf32>
    %42 = arith.addf %39, %41 : vector<48x128xf32>
    %c0_51 = arith.constant 0 : index
    %c1_52 = arith.constant 1 : index
    %c0_53 = arith.constant 0 : index
    %c0_54 = arith.constant 0 : index
    %43 = vector.load %arg4[%c0_51, %c1_52, %c0_53, %c0_54] : memref<1x4x48x128xf32, #tpu.memory_space<vmem>>, vector<1x1x48x128xf32>
    %44 = vector.shape_cast %43 : vector<1x1x48x128xf32> to vector<48x128xf32>
    %45 = vector.shape_cast %42 : vector<48x128xf32> to vector<1x1x48x128xf32>
    tpu.vector_store %arg4[%c0_51, %c1_52, %c0_53, %c0_54], %45 {strides = array<i32>} : memref<1x4x48x128xf32, #tpu.memory_space<vmem>>, vector<1x1x48x128xf32>,
    %c0_55 = arith.constant 0 : index
    %c2_56 = arith.constant 2 : index
    %c0_57 = arith.constant 0 : index
    %c0_58 = arith.constant 0 : index
    %46 = vector.load %arg1[%c0_55, %c2_56, %c0_57, %c0_58] : memref<1x6x48x36xbf16, #tpu.memory_space<vmem>>, vector<1x1x48x36xbf16>
    %47 = vector.shape_cast %46 : vector<1x1x48x36xbf16> to vector<48x36xbf16>
    %c0_59 = arith.constant 0 : index
    %c0_60 = arith.constant 0 : index
    %c0_61 = arith.constant 0 : index
    %48 = vector.load %arg2[%c0_59, %c0_60, %c0_61] : memref<3x36x128xbf16, #tpu.memory_space<vmem>>, vector<1x36x128xbf16>
    %49 = vector.shape_cast %48 : vector<1x36x128xbf16> to vector<36x128xbf16>
    %cst_62 = arith.constant dense<0.000000e+00> : vector<48x128xf32>
    %50 = tpu.matmul %47, %49, %cst_62 {dimension_numbers = #tpu.dot_dimension_numbers<[1], [0], [0], [1], [0, 0, 1, 1], [], []>} : vector<48x36xbf16>, vector<36x128xbf16>, vector<48x128xf32> -> vector<48x128xf32>
    %c0_63 = arith.constant 0 : index
    %c3_64 = arith.constant 3 : index
    %c0_65 = arith.constant 0 : index
    %c0_66 = arith.constant 0 : index
    %51 = vector.load %arg1[%c0_63, %c3_64, %c0_65, %c0_66] : memref<1x6x48x36xbf16, #tpu.memory_space<vmem>>, vector<1x1x48x36xbf16>
    %52 = vector.shape_cast %51 : vector<1x1x48x36xbf16> to vector<48x36xbf16>
    %c1_67 = arith.constant 1 : index
    %c0_68 = arith.constant 0 : index
    %c0_69 = arith.constant 0 : index
    %53 = vector.load %arg2[%c1_67, %c0_68, %c0_69] : memref<3x36x128xbf16, #tpu.memory_space<vmem>>, vector<1x36x128xbf16>
    %54 = vector.shape_cast %53 : vector<1x36x128xbf16> to vector<36x128xbf16>
    %cst_70 = arith.constant dense<0.000000e+00> : vector<48x128xf32>
    %55 = tpu.matmul %52, %54, %cst_70 {dimension_numbers = #tpu.dot_dimension_numbers<[1], [0], [0], [1], [0, 0, 1, 1], [], []>} : vector<48x36xbf16>, vector<36x128xbf16>, vector<48x128xf32> -> vector<48x128xf32>
    %56 = arith.addf %50, %55 : vector<48x128xf32>
    %c0_71 = arith.constant 0 : index
    %c4 = arith.constant 4 : index
    %c0_72 = arith.constant 0 : index
    %c0_73 = arith.constant 0 : index
    %57 = vector.load %arg1[%c0_71, %c4, %c0_72, %c0_73] : memref<1x6x48x36xbf16, #tpu.memory_space<vmem>>, vector<1x1x48x36xbf16>
    %58 = vector.shape_cast %57 : vector<1x1x48x36xbf16> to vector<48x36xbf16>
    %c2_74 = arith.constant 2 : index
    %c0_75 = arith.constant 0 : index
    %c0_76 = arith.constant 0 : index
    %59 = vector.load %arg2[%c2_74, %c0_75, %c0_76] : memref<3x36x128xbf16, #tpu.memory_space<vmem>>, vector<1x36x128xbf16>
    %60 = vector.shape_cast %59 : vector<1x36x128xbf16> to vector<36x128xbf16>
    %cst_77 = arith.constant dense<0.000000e+00> : vector<48x128xf32>
    %61 = tpu.matmul %58, %60, %cst_77 {dimension_numbers = #tpu.dot_dimension_numbers<[1], [0], [0], [1], [0, 0, 1, 1], [], []>} : vector<48x36xbf16>, vector<36x128xbf16>, vector<48x128xf32> -> vector<48x128xf32>
    %62 = arith.addf %56, %61 : vector<48x128xf32>
    %c0_78 = arith.constant 0 : index
    %c0_79 = arith.constant 0 : index
    %63 = vector.load %arg3[%c0_78, %c0_79] : memref<1x128xf32, #tpu.memory_space<vmem>>, vector<1x128xf32>
    %64 = vector.broadcast %63 : vector<1x128xf32> to vector<48x128xf32>
    %65 = arith.addf %62, %64 : vector<48x128xf32>
    %c0_80 = arith.constant 0 : index
    %c2_81 = arith.constant 2 : index
    %c0_82 = arith.constant 0 : index
    %c0_83 = arith.constant 0 : index
    %66 = vector.load %arg4[%c0_80, %c2_81, %c0_82, %c0_83] : memref<1x4x48x128xf32, #tpu.memory_space<vmem>>, vector<1x1x48x128xf32>
    %67 = vector.shape_cast %66 : vector<1x1x48x128xf32> to vector<48x128xf32>
    %68 = vector.shape_cast %65 : vector<48x128xf32> to vector<1x1x48x128xf32>
    tpu.vector_store %arg4[%c0_80, %c2_81, %c0_82, %c0_83], %68 {strides = array<i32>} : memref<1x4x48x128xf32, #tpu.memory_space<vmem>>, vector<1x1x48x128xf32>,
    %c0_84 = arith.constant 0 : index
    %c3_85 = arith.constant 3 : index
    %c0_86 = arith.constant 0 : index
    %c0_87 = arith.constant 0 : index
    %69 = vector.load %arg1[%c0_84, %c3_85, %c0_86, %c0_87] : memref<1x6x48x36xbf16, #tpu.memory_space<vmem>>, vector<1x1x48x36xbf16>
    %70 = vector.shape_cast %69 : vector<1x1x48x36xbf16> to vector<48x36xbf16>
    %c0_88 = arith.constant 0 : index
    %c0_89 = arith.constant 0 : index
    %c0_90 = arith.constant 0 : index
    %71 = vector.load %arg2[%c0_88, %c0_89, %c0_90] : memref<3x36x128xbf16, #tpu.memory_space<vmem>>, vector<1x36x128xbf16>
    %72 = vector.shape_cast %71 : vector<1x36x128xbf16> to vector<36x128xbf16>
    %cst_91 = arith.constant dense<0.000000e+00> : vector<48x128xf32>
    %73 = tpu.matmul %70, %72, %cst_91 {dimension_numbers = #tpu.dot_dimension_numbers<[1], [0], [0], [1], [0, 0, 1, 1], [], []>} : vector<48x36xbf16>, vector<36x128xbf16>, vector<48x128xf32> -> vector<48x128xf32>
    %c0_92 = arith.constant 0 : index
    %c4_93 = arith.constant 4 : index
    %c0_94 = arith.constant 0 : index
    %c0_95 = arith.constant 0 : index
    %74 = vector.load %arg1[%c0_92, %c4_93, %c0_94, %c0_95] : memref<1x6x48x36xbf16, #tpu.memory_space<vmem>>, vector<1x1x48x36xbf16>
    %75 = vector.shape_cast %74 : vector<1x1x48x36xbf16> to vector<48x36xbf16>
    %c1_96 = arith.constant 1 : index
    %c0_97 = arith.constant 0 : index
    %c0_98 = arith.constant 0 : index
    %76 = vector.load %arg2[%c1_96, %c0_97, %c0_98] : memref<3x36x128xbf16, #tpu.memory_space<vmem>>, vector<1x36x128xbf16>
    %77 = vector.shape_cast %76 : vector<1x36x128xbf16> to vector<36x128xbf16>
    %cst_99 = arith.constant dense<0.000000e+00> : vector<48x128xf32>
    %78 = tpu.matmul %75, %77, %cst_99 {dimension_numbers = #tpu.dot_dimension_numbers<[1], [0], [0], [1], [0, 0, 1, 1], [], []>} : vector<48x36xbf16>, vector<36x128xbf16>, vector<48x128xf32> -> vector<48x128xf32>
    %79 = arith.addf %73, %78 : vector<48x128xf32>
    %c0_100 = arith.constant 0 : index
    %c5 = arith.constant 5 : index
    %c0_101 = arith.constant 0 : index
    %c0_102 = arith.constant 0 : index
    %80 = vector.load %arg1[%c0_100, %c5, %c0_101, %c0_102] : memref<1x6x48x36xbf16, #tpu.memory_space<vmem>>, vector<1x1x48x36xbf16>
    %81 = vector.shape_cast %80 : vector<1x1x48x36xbf16> to vector<48x36xbf16>
    %c2_103 = arith.constant 2 : index
    %c0_104 = arith.constant 0 : index
    %c0_105 = arith.constant 0 : index
    %82 = vector.load %arg2[%c2_103, %c0_104, %c0_105] : memref<3x36x128xbf16, #tpu.memory_space<vmem>>, vector<1x36x128xbf16>
    %83 = vector.shape_cast %82 : vector<1x36x128xbf16> to vector<36x128xbf16>
    %cst_106 = arith.constant dense<0.000000e+00> : vector<48x128xf32>
    %84 = tpu.matmul %81, %83, %cst_106 {dimension_numbers = #tpu.dot_dimension_numbers<[1], [0], [0], [1], [0, 0, 1, 1], [], []>} : vector<48x36xbf16>, vector<36x128xbf16>, vector<48x128xf32> -> vector<48x128xf32>
    %85 = arith.addf %79, %84 : vector<48x128xf32>
    %c0_107 = arith.constant 0 : index
    %c0_108 = arith.constant 0 : index
    %86 = vector.load %arg3[%c0_107, %c0_108] : memref<1x128xf32, #tpu.memory_space<vmem>>, vector<1x128xf32>
    %87 = vector.broadcast %86 : vector<1x128xf32> to vector<48x128xf32>
    %88 = arith.addf %85, %87 : vector<48x128xf32>
    %c0_109 = arith.constant 0 : index
    %c3_110 = arith.constant 3 : index
    %c0_111 = arith.constant 0 : index
    %c0_112 = arith.constant 0 : index
    %89 = vector.load %arg4[%c0_109, %c3_110, %c0_111, %c0_112] : memref<1x4x48x128xf32, #tpu.memory_space<vmem>>, vector<1x1x48x128xf32>
    %90 = vector.shape_cast %89 : vector<1x1x48x128xf32> to vector<48x128xf32>
    %91 = vector.shape_cast %88 : vector<48x128xf32> to vector<1x1x48x128xf32>
    tpu.vector_store %arg4[%c0_109, %c3_110, %c0_111, %c0_112], %91 {strides = array<i32>} : memref<1x4x48x128xf32, #tpu.memory_space<vmem>>, vector<1x1x48x128xf32>,
    return
  }
  func.func @transform_0(%arg0: i32) -> (i32, i32, i32, i32) {
    %c0_i32 = arith.constant 0 : i32
    %c0_i32_0 = arith.constant 0 : i32
    %c0_i32_1 = arith.constant 0 : i32
    %c0_i32_2 = arith.constant 0 : i32
    return %arg0, %c0_i32, %c0_i32_0, %c0_i32_1 : i32, i32, i32, i32
  }
  func.func @transform_1(%arg0: i32) -> (i32, i32, i32) {
    %c0_i32 = arith.constant 0 : i32
    %c0_i32_0 = arith.constant 0 : i32
    %c0_i32_1 = arith.constant 0 : i32
    %c0_i32_2 = arith.constant 0 : i32
    return %c0_i32, %c0_i32_0, %c0_i32_1 : i32, i32, i32
  }
  func.func @transform_2(%arg0: i32) -> (i32, i32) {
    %c0_i32 = arith.constant 0 : i32
    %c0_i32_0 = arith.constant 0 : i32
    %c0_i32_1 = arith.constant 0 : i32
    return %c0_i32, %c0_i32_0 : i32, i32
  }
  func.func @transform_3(%arg0: i32) -> (i32, i32, i32, i32) {
    %c0_i32 = arith.constant 0 : i32
    %c0_i32_0 = arith.constant 0 : i32
    %c0_i32_1 = arith.constant 0 : i32
    %c0_i32_2 = arith.constant 0 : i32
    return %arg0, %c0_i32, %c0_i32_0, %c0_i32_1 : i32, i32, i32, i32
  }
}

</mosaic_0001>

<llo_original>
// kernel: deconv_subpixel_apply.1
$region0: #{deconv_subpixel_apply.1}
  #allocation0 [shape = 'u32[]', space=smem, size = 0x4, offset = 0x4, fixed_abs, tag = 'smem constant byte address 0x4 - core index']
  #allocation1 [shape = 'u32[144,128]{1,0:T(1,128)}', space=vmem, size = 0x12000, scoped, tag = 'internal scratch']
  %s0 = inlined_call_operand.vmem [shape: bf16[2,6,48,36], index: 0, kind: input, shape index: {}]
  %s1 = inlined_call_operand.vmem [shape: bf16[3,36,128], index: 1, kind: input, shape index: {}]
  %s2 = inlined_call_operand.vmem [shape: f32[1,128], index: 2, kind: input, shape index: {}]
  %s3 = inlined_call_operand.vmem [shape: f32[2,4,48,128], index: 3, kind: output, shape index: {}]
  %s4 = sld [smem:[#allocation0]]
  $region45: #{deconv_subpixel_apply.1} parent=0
    _
  %s6 = ssub.s32 1, %s4
  %s7 = scalar_select 0, %s6, %s4
  loop: start=0, step=1, limit=4
  $region2: #{deconv_subpixel_apply.1} parent=0 // loop_pre_header
    _
  $region3: #{deconv_subpixel_apply.1} parent=0 // loop_header
    %s9 = sphi 0, %s13
    %p10 = scmp.ge.s32.totalorder %s9, 4
    %s19 = sphi 0, %s21
    %s22 = sphi 0, %s19
    %s23 = sphi 0, %s22
    %s39 = sphi 0, %s23
    %s43 = sphi 0, %s43
    %s45 = sphi 0, %s43
    %s46 = sphi 0, %s45
    %s60 = sphi 0, %s46
    %s64 = sphi 0, %s64
    %s66 = sphi 0, %s64
    %s67 = sphi 0, %s66
    %s81 = sphi 0, %s67
    %s87 = sphi 0, %s89
    %s90 = sphi 0, %s87
    %s91 = sphi 0, %s90
    %s107 = sphi 0, %s91
  $region4: #{deconv_subpixel_apply.1} parent=0 // loop_header_branch
    %12 = sbr.rel (%p10) target = $region8
  $region5: #{deconv_subpixel_apply.1} parent=0 // loop_body
    %s14 = ssub.s32 %s9, 1
    %s15 = ssub.s32 %s9, 2
    %s16 = sadd.s32 %s9, 1
    %s17 = ssub.s32 %s9, %s16
    %p18 = scmp.eq.s32.totalorder %s17, 0
    %s20 = sadd.s32 %s19, 1
    %s21 = scalar_select %p18, %s19, %s20
    %p24 = pneg %p18
    %p25 = scmp.eq.s32.totalorder %s9, 1
    %p26 = por %p24, %p25
    %p27 = scmp.ne.s32.totalorder %s19, %s22
    %p28 = scmp.eq.s32.totalorder %s9, 0
    %p29 = por %p27, %p28
    %p30 = scmp.ne.s32.totalorder %s19, %s22
    %p31 = scmp.eq.s32.totalorder %s14, 1
    %p32 = por %p30, %p31
    %p33 = scmp.ne.s32.totalorder %s22, %s23
    %p34 = scmp.eq.s32.totalorder %s14, 0
    %p35 = por %p33, %p34
    %p36 = scmp.ne.s32.totalorder %s22, %s23
    %p37 = scmp.eq.s32.totalorder %s15, 1
    %p38 = por %p36, %p37
    %p40 = scmp.ne.s32.totalorder %s23, %s39
    %p41 = scmp.eq.s32.totalorder %s15, 0
    %p42 = por %p40, %p41
    %s44 = sadd.s32 %s43, 1
    %p47 = scmp.eq.s32.totalorder %s9, 1
    %p48 = scmp.ne.s32.totalorder %s43, %s45
    %p49 = scmp.eq.s32.totalorder %s9, 0
    %p50 = por %p48, %p49
    %p51 = scmp.ne.s32.totalorder %s43, %s45
    %p52 = scmp.eq.s32.totalorder %s14, 1
    %p53 = por %p51, %p52
    %p54 = scmp.ne.s32.totalorder %s45, %s46
    %p55 = scmp.eq.s32.totalorder %s14, 0
    %p56 = por %p54, %p55
    %p57 = scmp.ne.s32.totalorder %s45, %s46
    %p58 = scmp.eq.s32.totalorder %s15, 1
    %p59 = por %p57, %p58
    %p61 = scmp.ne.s32.totalorder %s46, %s60
    %p62 = scmp.eq.s32.totalorder %s15, 0
    %p63 = por %p61, %p62
    %s65 = sadd.s32 %s64, 1
    %p68 = scmp.eq.s32.totalorder %s9, 1
    %p69 = scmp.ne.s32.totalorder %s64, %s66
    %p70 = scmp.eq.s32.totalorder %s9, 0
    %p71 = por %p69, %p70
    %p72 = scmp.ne.s32.totalorder %s64, %s66
    %p73 = scmp.eq.s32.totalorder %s14, 1
    %p74 = por %p72, %p73
    %p75 = scmp.ne.s32.totalorder %s66, %s67
    %p76 = scmp.eq.s32.totalorder %s14, 0
    %p77 = por %p75, %p76
    %p78 = scmp.ne.s32.totalorder %s66, %s67
    %p79 = scmp.eq.s32.totalorder %s15, 1
    %p80 = por %p78, %p79
    %p82 = scmp.ne.s32.totalorder %s67, %s81
    %p83 = scmp.eq.s32.totalorder %s15, 0
    %p84 = por %p82, %p83
    %s85 = ssub.s32 %s9, %s16
    %p86 = scmp.eq.s32.totalorder %s85, 0
    %s88 = sadd.s32 %s87, 1
    %s89 = scalar_select %p86, %s87, %s88
    %p92 = pneg %p86
    %p93 = scmp.eq.s32.totalorder %s9, 1
    %p94 = por %p92, %p93
    %p95 = scmp.ne.s32.totalorder %s87, %s90
    %p96 = scmp.eq.s32.totalorder %s9, 0
    %p97 = por %p95, %p96
    %p98 = scmp.ne.s32.totalorder %s87, %s90
    %p99 = scmp.eq.s32.totalorder %s14, 1
    %p100 = por %p98, %p99
    %p101 = scmp.ne.s32.totalorder %s90, %s91
    %p102 = scmp.eq.s32.totalorder %s14, 0
    %p103 = por %p101, %p102
    %p104 = scmp.ne.s32.totalorder %s90, %s91
    %p105 = scmp.eq.s32.totalorder %s15, 1
    %p106 = por %p104, %p105
    %p108 = scmp.ne.s32.totalorder %s91, %s107
    %p109 = scmp.eq.s32.totalorder %s15, 0
    %p110 = por %p108, %p109
    %p111 = scmp.le.s32.totalorder 1, %s9
    %p112 = scmp.lt.s32.totalorder %s9, 3
    %p113 = pnand %p111, %p112
    %p114 = pneg %p113
    // Predicated region
    $region9: #{deconv_subpixel_apply.1} parent=5 // pred_check
      _
    $region10: #{deconv_subpixel_apply.1} parent=5 // pred_check_branch
      %116 = sbr.rel (%p113) target = $region12
    $region11: #{deconv_subpixel_apply.1} parent=5 // pred_region
      %s117 = ssub.s32 %s9, 1
      // Predicated region
      $region13: #{deconv_subpixel_apply.1} parent=11 // pred_check
        %p118 = pneg %p56
      $region14: #{deconv_subpixel_apply.1} parent=11 // pred_check_branch
        %120 = sbr.rel (%p118) target = $region16
      $region15: #{deconv_subpixel_apply.1} parent=11 // pred_region
        _
      $region16: #{deconv_subpixel_apply.1} parent=11 // pred_fallthru
        _
      // Predicated region
      $region17: #{deconv_subpixel_apply.1} parent=11 // pred_check
        %p121 = pneg %p77
      $region18: #{deconv_subpixel_apply.1} parent=11 // pred_check_branch
        %123 = sbr.rel (%p121) target = $region20
      $region19: #{deconv_subpixel_apply.1} parent=11 // pred_region
        _
      $region20: #{deconv_subpixel_apply.1} parent=11 // pred_fallthru
        _
    $region12: #{deconv_subpixel_apply.1} parent=5 // pred_fallthru
      _
    %p124 = scmp.lt.s32.totalorder %s9, 2
    // Predicated region
    $region21: #{deconv_subpixel_apply.1} parent=5 // pred_check
      %p125 = pneg %p124
    $region22: #{deconv_subpixel_apply.1} parent=5 // pred_check_branch
      %127 = sbr.rel (%p125) target = $region24
    $region23: #{deconv_subpixel_apply.1} parent=5 // pred_region
      // Predicated region
      $region25: #{deconv_subpixel_apply.1} parent=23 // pred_check
        %p128 = pneg %p29
      $region26: #{deconv_subpixel_apply.1} parent=23 // pred_check_branch
        %130 = sbr.rel (%p128) target = $region28
      $region27: #{deconv_subpixel_apply.1} parent=23 // pred_region
        %p131 = scmp.lt.s32.totalorder %s9, 1
        %s132 = scalar_select %p131, %s9, 1
        %s133 = smul.addr %s132, 36
        %s134 = smul.addr %s133, 4
        %s135 = scalar_lea.vmem %s0, %s134
      $region28: #{deconv_subpixel_apply.1} parent=23 // pred_fallthru
        _
    $region24: #{deconv_subpixel_apply.1} parent=5 // pred_fallthru
      _
    %p136 = scmp.le.s32.totalorder 1, %s9
    %p137 = scmp.lt.s32.totalorder %s9, 3
    %p138 = pnand %p136, %p137
    %p139 = pneg %p138
    // Predicated region
    $region29: #{deconv_subpixel_apply.1} parent=5 // pred_check
      _
    $region30: #{deconv_subpixel_apply.1} parent=5 // pred_check_branch
      %141 = sbr.rel (%p138) target = $region32
    $region31: #{deconv_subpixel_apply.1} parent=5 // pred_region
      %s142 = ssub.s32 %s9, 1
      %p143 = scmp.lt.s32.totalorder %s14, 1
      %s144 = scalar_select %p143, %s14, 1
      %s145 = smul.addr %s144, 36
      %s146 = smul.addr %s145, 4
      %s147 = scalar_lea.vmem %s0, %s146
      %p148 = pneg %p35
      %p149 = pneg %p32
      %p150 = pneg %p56
      %p151 = pneg %p53
      %p152 = pneg %p77
      %p153 = pneg %p74
      %p154 = pneg %p103
      %p155 = pneg %p100
      %p156 = scmp.lt.s32.totalorder %s14, 1
      %s157 = scalar_select %p156, %s14, 1
      %s158 = smul.addr %s157, 24
      %s159 = smul.addr %s158, 8
      %s160 = scalar_lea.vmem %s3, %s159
      %p161 = scmp.lt.s32.totalorder %s14, 1
      %s162 = scalar_select %p161, %s14, 1
      %s163 = smul.addr %s162, 36
      %s164 = smul.addr %s163, 4
      %s165 = scalar_lea.vmem %s0, %s164
      %p166 = scmp.lt.s32.totalorder %s14, 1
      %s167 = scalar_select %p166, %s14, 1
      %s168 = smul.addr %s167, 24
      %s169 = smul.addr %s168, 8
      %s170 = scalar_lea.vmem %s3, %s169
      %v172 = vld [vmem:[%s165] sm:$0xf]
      %v173 = vld [vmem:[%s165 + $0x4] sm:$0xf]
      %v174 = vld [vmem:[%s165 + $0x8] sm:$0xf]
      %v175 = vld [vmem:[%s165 + $0xc] sm:$0xf]
      %v176 = vld [vmem:[%s165 + $0x10] sm:$0xf]
      %v177 = vld [vmem:[%s165 + $0x14] sm:$0xf]
      %v178 = vld [vmem:[%s1] sm:$0xf]
      %v179 = vld [vmem:[%s1 + $0x4] sm:$0xf]
      %v180 = vld [vmem:[%s1 + $0x8] sm:$0xf]
      %v181 = vld [vmem:[%s1 + $0xc] sm:$0xf]
      %v182 = vld [vmem:[%s1 + $0x10] sm:$0x3]
      %s183 = scalar_lea.vmem %s165, 24
      %v184 = vld [vmem:[%s183] sm:$0xf]
      %v185 = vld [vmem:[%s183 + $0x4] sm:$0xf]
      %v186 = vld [vmem:[%s183 + $0x8] sm:$0xf]
      %v187 = vld [vmem:[%s183 + $0xc] sm:$0xf]
      %v188 = vld [vmem:[%s183 + $0x10] sm:$0xf]
      %v189 = vld [vmem:[%s183 + $0x14] sm:$0xf]
      %s190 = scalar_lea.vmem %s1, 20
      %v191 = vld [vmem:[%s190] sm:$0xf]
      %v192 = vld [vmem:[%s190 + $0x4] sm:$0xf]
      %v193 = vld [vmem:[%s190 + $0x8] sm:$0xf]
      %v194 = vld [vmem:[%s190 + $0xc] sm:$0xf]
      %v195 = vld [vmem:[%s190 + $0x10] sm:$0x3]
      %v202 = vunpack.c.l.b16 %v184
      %v203 = vunpack.c.l.b16 %v185
      %v204 = vunpack.c.l.b16 %v186
      %v205 = vunpack.c.l.b16 %v187
      %v206 = vunpack.c.l.b16 %v188
      %v207 = vunpack.c.l.b16 %v189
      %v208 = vpack.c.b16 %v203, %v202
      %v209 = vpack.c.b16 %v205, %v204
      %v210 = vpack.c.b16 %v207, %v206
      %v216 = vunpack.c.l.b16 %v191
      %v217 = vunpack.c.l.b16 %v192
      %v218 = vunpack.c.l.b16 %v193
      %v219 = vunpack.c.l.b16 %v194
      %v220 = vunpack.c.l.b16 %v195
      %v221 = vpack.c.b16 %v217, %v216
      %v222 = vpack.c.b16 %v219, %v218
      %v223 = vpack.c.b16 %v220, %v220
      %vm226 = vcmask 293888
      %v228 = vsel %vm226, %v208, 0
      %v231 = vsel %vm226, %v209, 0
      %v234 = vsel %vm226, %v210, 0
      %vm236 = vcmask 1041408
      %v238 = vsel %vm236, %v223, 0
      %240 = vmatprep.subr.bf16.mxu0 0
      %241 = vmatpush1.bf16.msra.mxu0 %v221
      %242 = vmatprep.subr.bf16.mxu0 0
      %243 = vmatpush1.bf16.msra.mxu0 %v222
      %244 = vmatprep.subr.bf16.mxu0 0
      %245 = vmatpush1.bf16.msra.mxu0 %v238
      %246 = vmatprep.subr.bf16.mxu0 0
      %247 = vmatpush1.bf16.msra.mxu0 0
      %248 = vmatprep.subr.bf16.mxu0 0
      %249 = vmatpush1.bf16.msra.mxu0 0
      %250 = vmatprep.subr.bf16.mxu0 0
      %251 = vmatpush1.bf16.msra.mxu0 0
      %252 = vmatprep.subr.bf16.mxu0 0
      %253 = vmatpush1.bf16.msra.mxu0 0
      %254 = vmatprep.subr.bf16.mxu0 0
      %255 = vmatpush1.bf16.msra.mxu0 0
      %256 = vmatprep.subr.bf16.mxu0 0
      %257 = vmatpush1.bf16.msra.mxu0 0
      %258 = vmatprep.subr.bf16.mxu0 0
      %259 = vmatpush1.bf16.msra.mxu0 0
      %260 = vmatprep.subr.bf16.mxu0 0
      %261 = vmatpush1.bf16.msra.mxu0 0
      %262 = vmatprep.subr.bf16.mxu0 0
      %263 = vmatpush1.bf16.msra.mxu0 0
      %264 = vmatprep.subr.bf16.mxu0 0
      %265 = vmatpush1.bf16.msra.mxu0 0
      %266 = vmatprep.subr.bf16.mxu0 0
      %267 = vmatpush1.bf16.msra.mxu0 0
      %268 = vmatprep.subr.bf16.mxu0 0
      %269 = vmatpush1.bf16.msra.mxu0 0
      %270 = vmatprep.subr.bf16.mxu0 0
      %271 = vmatpush1.bf16.msra.mxu0 0
      %272 = vmatprep.mubr.bf16.mxu0 0
      %273 = vmatmul.mubr.bf16.gmra.mrb[0].mxu0 %v228
      %v274 = vpop.f32.mrb[0].mxu0
      %v275 = vadd.f32 0.0, %v274
      %v276 = vpop.f32.mrb[0].mxu0
      %v277 = vpop.f32.mrb[0].mxu0
      %v278 = vadd.f32 0.0, %v277
      %v279 = vpop.f32.mrb[0].mxu0
      %280 = vmatprep.mubr.bf16.mxu0 0
      %281 = vmatmul.mubr.bf16.gmra.mrb[0].mxu0 %v231
      %v282 = vpop.f32.mrb[0].mxu0
      %v283 = vadd.f32 0.0, %v282
      %v284 = vpop.f32.mrb[0].mxu0
      %v285 = vpop.f32.mrb[0].mxu0
      %v286 = vadd.f32 0.0, %v285
      %v287 = vpop.f32.mrb[0].mxu0
      %288 = vmatprep.mubr.bf16.mxu0 0
      %289 = vmatmul.mubr.bf16.gmra.mrb[0].mxu0 %v234
      %v290 = vpop.f32.mrb[0].mxu0
      %v291 = vadd.f32 0.0, %v290
      %v292 = vpop.f32.mrb[0].mxu0
      %v293 = vpop.f32.mrb[0].mxu0
      %v294 = vadd.f32 0.0, %v293
      %v295 = vpop.f32.mrb[0].mxu0
      %296 = vdwg.mxu0
      %v303 = vunpack.c.l.b16 %v172
      %v304 = vunpack.c.l.b16 %v173
      %v305 = vunpack.c.l.b16 %v174
      %v306 = vunpack.c.l.b16 %v175
      %v307 = vunpack.c.l.b16 %v176
      %v308 = vunpack.c.l.b16 %v177
      %v309 = vpack.c.b16 %v304, %v303
      %v310 = vpack.c.b16 %v306, %v305
      %v311 = vpack.c.b16 %v308, %v307
      %v317 = vunpack.c.l.b16 %v178
      %v318 = vunpack.c.l.b16 %v179
      %v319 = vunpack.c.l.b16 %v180
      %v320 = vunpack.c.l.b16 %v181
      %v321 = vunpack.c.l.b16 %v182
      %v322 = vpack.c.b16 %v318, %v317
      %v323 = vpack.c.b16 %v320, %v319
      %v324 = vpack.c.b16 %v321, %v321
      %v328 = vsel %vm226, %v309, 0
      %v331 = vsel %vm226, %v310, 0
      %v334 = vsel %vm226, %v311, 0
      %v337 = vsel %vm236, %v324, 0
      %339 = vmatprep.subr.bf16.mxu0 0
      %340 = vmatpush1.bf16.msra.mxu0 %v322
      %341 = vmatprep.subr.bf16.mxu0 0
      %342 = vmatpush1.bf16.msra.mxu0 %v323
      %343 = vmatprep.subr.bf16.mxu0 0
      %344 = vmatpush1.bf16.msra.mxu0 %v337
      %345 = vmatprep.subr.bf16.mxu0 0
      %346 = vmatpush1.bf16.msra.mxu0 0
      %347 = vmatprep.subr.bf16.mxu0 0
      %348 = vmatpush1.bf16.msra.mxu0 0
      %349 = vmatprep.subr.bf16.mxu0 0
      %350 = vmatpush1.bf16.msra.mxu0 0
      %351 = vmatprep.subr.bf16.mxu0 0
      %352 = vmatpush1.bf16.msra.mxu0 0
      %353 = vmatprep.subr.bf16.mxu0 0
      %354 = vmatpush1.bf16.msra.mxu0 0
      %355 = vmatprep.subr.bf16.mxu0 0
      %356 = vmatpush1.bf16.msra.mxu0 0
      %357 = vmatprep.subr.bf16.mxu0 0
      %358 = vmatpush1.bf16.msra.mxu0 0
      %359 = vmatprep.subr.bf16.mxu0 0
      %360 = vmatpush1.bf16.msra.mxu0 0
      %361 = vmatprep.subr.bf16.mxu0 0
      %362 = vmatpush1.bf16.msra.mxu0 0
      %363 = vmatprep.subr.bf16.mxu0 0
      %364 = vmatpush1.bf16.msra.mxu0 0
      %365 = vmatprep.subr.bf16.mxu0 0
      %366 = vmatpush1.bf16.msra.mxu0 0
      %367 = vmatprep.subr.bf16.mxu0 0
      %368 = vmatpush1.bf16.msra.mxu0 0
      %369 = vmatprep.subr.bf16.mxu0 0
      %370 = vmatpush1.bf16.msra.mxu0 0
      %371 = vmatprep.mubr.bf16.mxu0 0
      %372 = vmatmul.mubr.bf16.gmra.mrb[0].mxu0 %v328
      %v373 = vpop.f32.mrb[0].mxu0
      %v374 = vadd.f32 %v275, %v373
      %v375 = vpop.f32.mrb[0].mxu0
      %v376 = vpop.f32.mrb[0].mxu0
      %v377 = vadd.f32 %v278, %v376
      %v378 = vpop.f32.mrb[0].mxu0
      %379 = vmatprep.mubr.bf16.mxu0 0
      %380 = vmatmul.mubr.bf16.gmra.mrb[0].mxu0 %v331
      %v381 = vpop.f32.mrb[0].mxu0
      %v382 = vadd.f32 %v283, %v381
      %v383 = vpop.f32.mrb[0].mxu0
      %v384 = vpop.f32.mrb[0].mxu0
      %v385 = vadd.f32 %v286, %v384
      %v386 = vpop.f32.mrb[0].mxu0
      %387 = vmatprep.mubr.bf16.mxu0 0
      %388 = vmatmul.mubr.bf16.gmra.mrb[0].mxu0 %v334
      %v389 = vpop.f32.mrb[0].mxu0
      %v390 = vadd.f32 %v291, %v389
      %v391 = vpop.f32.mrb[0].mxu0
      %v392 = vpop.f32.mrb[0].mxu0
      %v393 = vadd.f32 %v294, %v392
      %v394 = vpop.f32.mrb[0].mxu0
      %395 = vdwg.mxu0
      %s396 = scalar_lea.vmem %s165, 48
      %v397 = vld [vmem:[%s396] sm:$0xf]
      %v398 = vld [vmem:[%s396 + $0x4] sm:$0xf]
      %v399 = vld [vmem:[%s396 + $0x8] sm:$0xf]
      %v400 = vld [vmem:[%s396 + $0xc] sm:$0xf]
      %v401 = vld [vmem:[%s396 + $0x10] sm:$0xf]
      %v402 = vld [vmem:[%s396 + $0x14] sm:$0xf]
      %s403 = scalar_lea.vmem %s1, 40
      %v404 = vld [vmem:[%s403] sm:$0xf]
      %v405 = vld [vmem:[%s403 + $0x4] sm:$0xf]
      %v406 = vld [vmem:[%s403 + $0x8] sm:$0xf]
      %v407 = vld [vmem:[%s403 + $0xc] sm:$0xf]
      %v408 = vld [vmem:[%s403 + $0x10] sm:$0x3]
      %v415 = vunpack.c.l.b16 %v397
      %v416 = vunpack.c.l.b16 %v398
      %v417 = vunpack.c.l.b16 %v399
      %v418 = vunpack.c.l.b16 %v400
      %v419 = vunpack.c.l.b16 %v401
      %v420 = vunpack.c.l.b16 %v402
      %v421 = vpack.c.b16 %v416, %v415
      %v422 = vpack.c.b16 %v418, %v417
      %v423 = vpack.c.b16 %v420, %v419
      %v429 = vunpack.c.l.b16 %v404
      %v430 = vunpack.c.l.b16 %v405
      %v431 = vunpack.c.l.b16 %v406
      %v432 = vunpack.c.l.b16 %v407
      %v433 = vunpack.c.l.b16 %v408
      %v434 = vpack.c.b16 %v430, %v429
      %v435 = vpack.c.b16 %v432, %v431
      %v436 = vpack.c.b16 %v433, %v433
      %v440 = vsel %vm226, %v421, 0
      %v443 = vsel %vm226, %v422, 0
      %v446 = vsel %vm226, %v423, 0
      %v449 = vsel %vm236, %v436, 0
      %451 = vmatprep.subr.bf16.mxu0 0
      %452 = vmatpush1.bf16.msra.mxu0 %v434
      %453 = vmatprep.subr.bf16.mxu0 0
      %454 = vmatpush1.bf16.msra.mxu0 %v435
      %455 = vmatprep.subr.bf16.mxu0 0
      %456 = vmatpush1.bf16.msra.mxu0 %v449
      %457 = vmatprep.subr.bf16.mxu0 0
      %458 = vmatpush1.bf16.msra.mxu0 0
      %459 = vmatprep.subr.bf16.mxu0 0
      %460 = vmatpush1.bf16.msra.mxu0 0
      %461 = vmatprep.subr.bf16.mxu0 0
      %462 = vmatpush1.bf16.msra.mxu0 0
      %463 = vmatprep.subr.bf16.mxu0 0
      %464 = vmatpush1.bf16.msra.mxu0 0
      %465 = vmatprep.subr.bf16.mxu0 0
      %466 = vmatpush1.bf16.msra.mxu0 0
      %467 = vmatprep.subr.bf16.mxu0 0
      %468 = vmatpush1.bf16.msra.mxu0 0
      %469 = vmatprep.subr.bf16.mxu0 0
      %470 = vmatpush1.bf16.msra.mxu0 0
      %471 = vmatprep.subr.bf16.mxu0 0
      %472 = vmatpush1.bf16.msra.mxu0 0
      %473 = vmatprep.subr.bf16.mxu0 0
      %474 = vmatpush1.bf16.msra.mxu0 0
      %475 = vmatprep.subr.bf16.mxu0 0
      %476 = vmatpush1.bf16.msra.mxu0 0
      %477 = vmatprep.subr.bf16.mxu0 0
      %478 = vmatpush1.bf16.msra.mxu0 0
      %479 = vmatprep.subr.bf16.mxu0 0
      %480 = vmatpush1.bf16.msra.mxu0 0
      %481 = vmatprep.subr.bf16.mxu0 0
      %482 = vmatpush1.bf16.msra.mxu0 0
      %483 = vmatprep.mubr.bf16.mxu0 0
      %484 = vmatmul.mubr.bf16.gmra.mrb[0].mxu0 %v440
      %v485 = vpop.f32.mrb[0].mxu0
      %v486 = vadd.f32 0.0, %v485
      %v487 = vpop.f32.mrb[0].mxu0
      %v488 = vpop.f32.mrb[0].mxu0
      %v489 = vadd.f32 0.0, %v488
      %v490 = vpop.f32.mrb[0].mxu0
      %491 = vmatprep.mubr.bf16.mxu0 0
      %492 = vmatmul.mubr.bf16.gmra.mrb[0].mxu0 %v443
      %v493 = vpop.f32.mrb[0].mxu0
      %v494 = vadd.f32 0.0, %v493
      %v495 = vpop.f32.mrb[0].mxu0
      %v496 = vpop.f32.mrb[0].mxu0
      %v497 = vadd.f32 0.0, %v496
      %v498 = vpop.f32.mrb[0].mxu0
      %499 = vmatprep.mubr.bf16.mxu0 0
      %500 = vmatmul.mubr.bf16.gmra.mrb[0].mxu0 %v446
      %v501 = vpop.f32.mrb[0].mxu0
      %v502 = vadd.f32 0.0, %v501
      %v503 = vpop.f32.mrb[0].mxu0
      %v504 = vpop.f32.mrb[0].mxu0
      %v505 = vadd.f32 0.0, %v504
      %v506 = vpop.f32.mrb[0].mxu0
      %507 = vdwg.mxu0
      %v508 = vadd.f32 %v374, %v486
      %v509 = vadd.f32 %v377, %v489
      %v510 = vadd.f32 %v382, %v494
      %v511 = vadd.f32 %v385, %v497
      %v512 = vadd.f32 %v390, %v502
      %v513 = vadd.f32 %v393, %v505
      %v514 = vld [vmem:[%s2] sm:$0x1]
      %v516 = vlaneseq
      %v517 = vshrl.u32 %v516, 7
      %v518 = vsub.s32 0, %v517
      %v519 = vrot.slane %v514, %v518
      %v521 = vadd.f32 %v508, %v519
      %v522 = vadd.f32 %v509, %v519
      %v523 = vadd.f32 %v510, %v519
      %v524 = vadd.f32 %v511, %v519
      %v525 = vadd.f32 %v512, %v519
      %v526 = vadd.f32 %v513, %v519
      %527 = vst [vmem:[%s170] sm:$0xff] %v521
      %528 = vst [vmem:[%s170 + $0x8] sm:$0xff] %v522
      %529 = vst [vmem:[%s170 + $0x10] sm:$0xff] %v523
      %530 = vst [vmem:[%s170 + $0x18] sm:$0xff] %v524
      %531 = vst [vmem:[%s170 + $0x20] sm:$0xff] %v525
      %532 = vst [vmem:[%s170 + $0x28] sm:$0xff] %v526
      %v533 = vld [vmem:[%s183] sm:$0xf]
      %v534 = vld [vmem:[%s183 + $0x4] sm:$0xf]
      %v535 = vld [vmem:[%s183 + $0x8] sm:$0xf]
      %v536 = vld [vmem:[%s183 + $0xc] sm:$0xf]
      %v537 = vld [vmem:[%s183 + $0x10] sm:$0xf]
      %v538 = vld [vmem:[%s183 + $0x14] sm:$0xf]
      %v539 = vld [vmem:[%s1] sm:$0xf]
      %v540 = vld [vmem:[%s1 + $0x4] sm:$0xf]
      %v541 = vld [vmem:[%s1 + $0x8] sm:$0xf]
      %v542 = vld [vmem:[%s1 + $0xc] sm:$0xf]
      %v543 = vld [vmem:[%s1 + $0x10] sm:$0x3]
      %v544 = vld [vmem:[%s396] sm:$0xf]
      %v545 = vld [vmem:[%s396 + $0x4] sm:$0xf]
      %v546 = vld [vmem:[%s396 + $0x8] sm:$0xf]
      %v547 = vld [vmem:[%s396 + $0xc] sm:$0xf]
      %v548 = vld [vmem:[%s396 + $0x10] sm:$0xf]
      %v549 = vld [vmem:[%s396 + $0x14] sm:$0xf]
      %v550 = vld [vmem:[%s190] sm:$0xf]
      %v551 = vld [vmem:[%s190 + $0x4] sm:$0xf]
      %v552 = vld [vmem:[%s190 + $0x8] sm:$0xf]
      %v553 = vld [vmem:[%s190 + $0xc] sm:$0xf]
      %v554 = vld [vmem:[%s190 + $0x10] sm:$0x3]
      %v561 = vunpack.c.l.b16 %v544
      %v562 = vunpack.c.l.b16 %v545
      %v563 = vunpack.c.l.b16 %v546
      %v564 = vunpack.c.l.b16 %v547
      %v565 = vunpack.c.l.b16 %v548
      %v566 = vunpack.c.l.b16 %v549
      %v567 = vpack.c.b16 %v562, %v561
      %v568 = vpack.c.b16 %v564, %v563
      %v569 = vpack.c.b16 %v566, %v565
      %v575 = vunpack.c.l.b16 %v550
      %v576 = vunpack.c.l.b16 %v551
      %v577 = vunpack.c.l.b16 %v552
      %v578 = vunpack.c.l.b16 %v553
      %v579 = vunpack.c.l.b16 %v554
      %v580 = vpack.c.b16 %v576, %v575
      %v581 = vpack.c.b16 %v578, %v577
      %v582 = vpack.c.b16 %v579, %v579
      %v586 = vsel %vm226, %v567, 0
      %v589 = vsel %vm226, %v568, 0
      %v592 = vsel %vm226, %v569, 0
      %v595 = vsel %vm236, %v582, 0
      %597 = vmatprep.subr.bf16.mxu0 0
      %598 = vmatpush1.bf16.msra.mxu0 %v580
      %599 = vmatprep.subr.bf16.mxu0 0
      %600 = vmatpush1.bf16.msra.mxu0 %v581
      %601 = vmatprep.subr.bf16.mxu0 0
      %602 = vmatpush1.bf16.msra.mxu0 %v595
      %603 = vmatprep.subr.bf16.mxu0 0
      %604 = vmatpush1.bf16.msra.mxu0 0
      %605 = vmatprep.subr.bf16.mxu0 0
      %606 = vmatpush1.bf16.msra.mxu0 0
      %607 = vmatprep.subr.bf16.mxu0 0
      %608 = vmatpush1.bf16.msra.mxu0 0
      %609 = vmatprep.subr.bf16.mxu0 0
      %610 = vmatpush1.bf16.msra.mxu0 0
      %611 = vmatprep.subr.bf16.mxu0 0
      %612 = vmatpush1.bf16.msra.mxu0 0
      %613 = vmatprep.subr.bf16.mxu0 0
      %614 = vmatpush1.bf16.msra.mxu0 0
      %615 = vmatprep.subr.bf16.mxu0 0
      %616 = vmatpush1.bf16.msra.mxu0 0
      %617 = vmatprep.subr.bf16.mxu0 0
      %618 = vmatpush1.bf16.msra.mxu0 0
      %619 = vmatprep.subr.bf16.mxu0 0
      %620 = vmatpush1.bf16.msra.mxu0 0
      %621 = vmatprep.subr.bf16.mxu0 0
      %622 = vmatpush1.bf16.msra.mxu0 0
      %623 = vmatprep.subr.bf16.mxu0 0
      %624 = vmatpush1.bf16.msra.mxu0 0
      %625 = vmatprep.subr.bf16.mxu0 0
      %626 = vmatpush1.bf16.msra.mxu0 0
      %627 = vmatprep.subr.bf16.mxu0 0
      %628 = vmatpush1.bf16.msra.mxu0 0
      %629 = vmatprep.mubr.bf16.mxu0 0
      %630 = vmatmul.mubr.bf16.gmra.mrb[0].mxu0 %v586
      %v631 = vpop.f32.mrb[0].mxu0
      %v632 = vadd.f32 0.0, %v631
      %v633 = vpop.f32.mrb[0].mxu0
      %v634 = vpop.f32.mrb[0].mxu0
      %v635 = vadd.f32 0.0, %v634
      %v636 = vpop.f32.mrb[0].mxu0
      %637 = vmatprep.mubr.bf16.mxu0 0
      %638 = vmatmul.mubr.bf16.gmra.mrb[0].mxu0 %v589
      %v639 = vpop.f32.mrb[0].mxu0
      %v640 = vadd.f32 0.0, %v639
      %v641 = vpop.f32.mrb[0].mxu0
      %v642 = vpop.f32.mrb[0].mxu0
      %v643 = vadd.f32 0.0, %v642
      %v644 = vpop.f32.mrb[0].mxu0
      %645 = vmatprep.mubr.bf16.mxu0 0
      %646 = vmatmul.mubr.bf16.gmra.mrb[0].mxu0 %v592
      %v647 = vpop.f32.mrb[0].mxu0
      %v648 = vadd.f32 0.0, %v647
      %v649 = vpop.f32.mrb[0].mxu0
      %v650 = vpop.f32.mrb[0].mxu0
      %v651 = vadd.f32 0.0, %v650
      %v652 = vpop.f32.mrb[0].mxu0
      %653 = vdwg.mxu0
      %v660 = vunpack.c.l.b16 %v533
      %v661 = vunpack.c.l.b16 %v534
      %v662 = vunpack.c.l.b16 %v535
      %v663 = vunpack.c.l.b16 %v536
      %v664 = vunpack.c.l.b16 %v537
      %v665 = vunpack.c.l.b16 %v538
      %v666 = vpack.c.b16 %v661, %v660
      %v667 = vpack.c.b16 %v663, %v662
      %v668 = vpack.c.b16 %v665, %v664
      %v674 = vunpack.c.l.b16 %v539
      %v675 = vunpack.c.l.b16 %v540
      %v676 = vunpack.c.l.b16 %v541
      %v677 = vunpack.c.l.b16 %v542
      %v678 = vunpack.c.l.b16 %v543
      %v679 = vpack.c.b16 %v675, %v674
      %v680 = vpack.c.b16 %v677, %v676
      %v681 = vpack.c.b16 %v678, %v678
      %v685 = vsel %vm226, %v666, 0
      %v688 = vsel %vm226, %v667, 0
      %v691 = vsel %vm226, %v668, 0
      %v694 = vsel %vm236, %v681, 0
      %696 = vmatprep.subr.bf16.mxu0 0
      %697 = vmatpush1.bf16.msra.mxu0 %v679
      %698 = vmatprep.subr.bf16.mxu0 0
      %699 = vmatpush1.bf16.msra.mxu0 %v680
      %700 = vmatprep.subr.bf16.mxu0 0
      %701 = vmatpush1.bf16.msra.mxu0 %v694
      %702 = vmatprep.subr.bf16.mxu0 0
      %703 = vmatpush1.bf16.msra.mxu0 0
      %704 = vmatprep.subr.bf16.mxu0 0
      %705 = vmatpush1.bf16.msra.mxu0 0
      %706 = vmatprep.subr.bf16.mxu0 0
      %707 = vmatpush1.bf16.msra.mxu0 0
      %708 = vmatprep.subr.bf16.mxu0 0
      %709 = vmatpush1.bf16.msra.mxu0 0
      %710 = vmatprep.subr.bf16.mxu0 0
      %711 = vmatpush1.bf16.msra.mxu0 0
      %712 = vmatprep.subr.bf16.mxu0 0
      %713 = vmatpush1.bf16.msra.mxu0 0
      %714 = vmatprep.subr.bf16.mxu0 0
      %715 = vmatpush1.bf16.msra.mxu0 0
      %716 = vmatprep.subr.bf16.mxu0 0
      %717 = vmatpush1.bf16.msra.mxu0 0
      %718 = vmatprep.subr.bf16.mxu0 0
      %719 = vmatpush1.bf16.msra.mxu0 0
      %720 = vmatprep.subr.bf16.mxu0 0
      %721 = vmatpush1.bf16.msra.mxu0 0
      %722 = vmatprep.subr.bf16.mxu0 0
      %723 = vmatpush1.bf16.msra.mxu0 0
      %724 = vmatprep.subr.bf16.mxu0 0
      %725 = vmatpush1.bf16.msra.mxu0 0
      %726 = vmatprep.subr.bf16.mxu0 0
      %727 = vmatpush1.bf16.msra.mxu0 0
      %728 = vmatprep.mubr.bf16.mxu0 0
      %729 = vmatmul.mubr.bf16.gmra.mrb[0].mxu0 %v685
      %v730 = vpop.f32.mrb[0].mxu0
      %v731 = vadd.f32 %v632, %v730
      %v732 = vpop.f32.mrb[0].mxu0
      %v733 = vpop.f32.mrb[0].mxu0
      %v734 = vadd.f32 %v635, %v733
      %v735 = vpop.f32.mrb[0].mxu0
      %736 = vmatprep.mubr.bf16.mxu0 0
      %737 = vmatmul.mubr.bf16.gmra.mrb[0].mxu0 %v688
      %v738 = vpop.f32.mrb[0].mxu0
      %v739 = vadd.f32 %v640, %v738
      %v740 = vpop.f32.mrb[0].mxu0
      %v741 = vpop.f32.mrb[0].mxu0
      %v742 = vadd.f32 %v643, %v741
      %v743 = vpop.f32.mrb[0].mxu0
      %744 = vmatprep.mubr.bf16.mxu0 0
      %745 = vmatmul.mubr.bf16.gmra.mrb[0].mxu0 %v691
      %v746 = vpop.f32.mrb[0].mxu0
      %v747 = vadd.f32 %v648, %v746
      %v748 = vpop.f32.mrb[0].mxu0
      %v749 = vpop.f32.mrb[0].mxu0
      %v750 = vadd.f32 %v651, %v749
      %v751 = vpop.f32.mrb[0].mxu0
      %752 = vdwg.mxu0
      %s753 = scalar_lea.vmem %s165, 72
      %v754 = vld [vmem:[%s753] sm:$0xf]
      %v755 = vld [vmem:[%s753 + $0x4] sm:$0xf]
      %v756 = vld [vmem:[%s753 + $0x8] sm:$0xf]
      %v757 = vld [vmem:[%s753 + $0xc] sm:$0xf]
      %v758 = vld [vmem:[%s753 + $0x10] sm:$0xf]
      %v759 = vld [vmem:[%s753 + $0x14] sm:$0xf]
      %v760 = vld [vmem:[%s403] sm:$0xf]
      %v761 = vld [vmem:[%s403 + $0x4] sm:$0xf]
      %v762 = vld [vmem:[%s403 + $0x8] sm:$0xf]
      %v763 = vld [vmem:[%s403 + $0xc] sm:$0xf]
      %v764 = vld [vmem:[%s403 + $0x10] sm:$0x3]
      %v771 = vunpack.c.l.b16 %v754
      %v772 = vunpack.c.l.b16 %v755
      %v773 = vunpack.c.l.b16 %v756
      %v774 = vunpack.c.l.b16 %v757
      %v775 = vunpack.c.l.b16 %v758
      %v776 = vunpack.c.l.b16 %v759
      %v777 = vpack.c.b16 %v772, %v771
      %v778 = vpack.c.b16 %v774, %v773
      %v779 = vpack.c.b16 %v776, %v775
      %v785 = vunpack.c.l.b16 %v760
      %v786 = vunpack.c.l.b16 %v761
      %v787 = vunpack.c.l.b16 %v762
      %v788 = vunpack.c.l.b16 %v763
      %v789 = vunpack.c.l.b16 %v764
      %v790 = vpack.c.b16 %v786, %v785
      %v791 = vpack.c.b16 %v788, %v787
      %v792 = vpack.c.b16 %v789, %v789
      %v796 = vsel %vm226, %v777, 0
      %v799 = vsel %vm226, %v778, 0
      %v802 = vsel %vm226, %v779, 0
      %v805 = vsel %vm236, %v792, 0
      %807 = vmatprep.subr.bf16.mxu0 0
      %808 = vmatpush1.bf16.msra.mxu0 %v790
      %809 = vmatprep.subr.bf16.mxu0 0
      %810 = vmatpush1.bf16.msra.mxu0 %v791
      %811 = vmatprep.subr.bf16.mxu0 0
      %812 = vmatpush1.bf16.msra.mxu0 %v805
      %813 = vmatprep.subr.bf16.mxu0 0
      %814 = vmatpush1.bf16.msra.mxu0 0
      %815 = vmatprep.subr.bf16.mxu0 0
      %816 = vmatpush1.bf16.msra.mxu0 0
      %817 = vmatprep.subr.bf16.mxu0 0
      %818 = vmatpush1.bf16.msra.mxu0 0
      %819 = vmatprep.subr.bf16.mxu0 0
      %820 = vmatpush1.bf16.msra.mxu0 0
      %821 = vmatprep.subr.bf16.mxu0 0
      %822 = vmatpush1.bf16.msra.mxu0 0
      %823 = vmatprep.subr.bf16.mxu0 0
      %824 = vmatpush1.bf16.msra.mxu0 0
      %825 = vmatprep.subr.bf16.mxu0 0
      %826 = vmatpush1.bf16.msra.mxu0 0
      %827 = vmatprep.subr.bf16.mxu0 0
      %828 = vmatpush1.bf16.msra.mxu0 0
      %829 = vmatprep.subr.bf16.mxu0 0
      %830 = vmatpush1.bf16.msra.mxu0 0
      %831 = vmatprep.subr.bf16.mxu0 0
      %832 = vmatpush1.bf16.msra.mxu0 0
      %833 = vmatprep.subr.bf16.mxu0 0
      %834 = vmatpush1.bf16.msra.mxu0 0
      %835 = vmatprep.subr.bf16.mxu0 0
      %836 = vmatpush1.bf16.msra.mxu0 0
      %837 = vmatprep.subr.bf16.mxu0 0
      %838 = vmatpush1.bf16.msra.mxu0 0
      %839 = vmatprep.mubr.bf16.mxu0 0
      %840 = vmatmul.mubr.bf16.gmra.mrb[0].mxu0 %v796
      %v841 = vpop.f32.mrb[0].mxu0
      %v842 = vadd.f32 0.0, %v841
      %v843 = vpop.f32.mrb[0].mxu0
      %v844 = vpop.f32.mrb[0].mxu0
      %v845 = vadd.f32 0.0, %v844
      %v846 = vpop.f32.mrb[0].mxu0
      %847 = vmatprep.mubr.bf16.mxu0 0
      %848 = vmatmul.mubr.bf16.gmra.mrb[0].mxu0 %v799
      %v849 = vpop.f32.mrb[0].mxu0
      %v850 = vadd.f32 0.0, %v849
      %v851 = vpop.f32.mrb[0].mxu0
      %v852 = vpop.f32.mrb[0].mxu0
      %v853 = vadd.f32 0.0, %v852
      %v854 = vpop.f32.mrb[0].mxu0
      %855 = vmatprep.mubr.bf16.mxu0 0
      %856 = vmatmul.mubr.bf16.gmra.mrb[0].mxu0 %v802
      %v857 = vpop.f32.mrb[0].mxu0
      %v858 = vadd.f32 0.0, %v857
      %v859 = vpop.f32.mrb[0].mxu0
      %v860 = vpop.f32.mrb[0].mxu0
      %v861 = vadd.f32 0.0, %v860
      %v862 = vpop.f32.mrb[0].mxu0
      %863 = vdwg.mxu0
      %v864 = vadd.f32 %v731, %v842
      %v865 = vadd.f32 %v734, %v845
      %v866 = vadd.f32 %v739, %v850
      %v867 = vadd.f32 %v742, %v853
      %v868 = vadd.f32 %v747, %v858
      %v869 = vadd.f32 %v750, %v861
      %v870 = vld [vmem:[%s2] sm:$0x1]
      %v872 = vlaneseq
      %v873 = vshrl.u32 %v872, 7
      %v874 = vsub.s32 0, %v873
      %v875 = vrot.slane %v870, %v874
      %v877 = vadd.f32 %v864, %v875
      %v878 = vadd.f32 %v865, %v875
      %v879 = vadd.f32 %v866, %v875
      %v880 = vadd.f32 %v867, %v875
      %v881 = vadd.f32 %v868, %v875
      %v882 = vadd.f32 %v869, %v875
      %s883 = scalar_lea.vmem %s170, 48
      %884 = vst [vmem:[%s883] sm:$0xff] %v877
      %885 = vst [vmem:[%s883 + $0x8] sm:$0xff] %v878
      %886 = vst [vmem:[%s883 + $0x10] sm:$0xff] %v879
      %887 = vst [vmem:[%s883 + $0x18] sm:$0xff] %v880
      %888 = vst [vmem:[%s883 + $0x20] sm:$0xff] %v881
      %889 = vst [vmem:[%s883 + $0x28] sm:$0xff] %v882
      %v890 = vld [vmem:[%s396] sm:$0xf]
      %v891 = vld [vmem:[%s396 + $0x4] sm:$0xf]
      %v892 = vld [vmem:[%s396 + $0x8] sm:$0xf]
      %v893 = vld [vmem:[%s396 + $0xc] sm:$0xf]
      %v894 = vld [vmem:[%s396 + $0x10] sm:$0xf]
      %v895 = vld [vmem:[%s396 + $0x14] sm:$0xf]
      %v896 = vld [vmem:[%s1] sm:$0xf]
      %v897 = vld [vmem:[%s1 + $0x4] sm:$0xf]
      %v898 = vld [vmem:[%s1 + $0x8] sm:$0xf]
      %v899 = vld [vmem:[%s1 + $0xc] sm:$0xf]
      %v900 = vld [vmem:[%s1 + $0x10] sm:$0x3]
      %v901 = vld [vmem:[%s753] sm:$0xf]
      %v902 = vld [vmem:[%s753 + $0x4] sm:$0xf]
      %v903 = vld [vmem:[%s753 + $0x8] sm:$0xf]
      %v904 = vld [vmem:[%s753 + $0xc] sm:$0xf]
      %v905 = vld [vmem:[%s753 + $0x10] sm:$0xf]
      %v906 = vld [vmem:[%s753 + $0x14] sm:$0xf]
      %v907 = vld [vmem:[%s190] sm:$0xf]
      %v908 = vld [vmem:[%s190 + $0x4] sm:$0xf]
      %v909 = vld [vmem:[%s190 + $0x8] sm:$0xf]
      %v910 = vld [vmem:[%s190 + $0xc] sm:$0xf]
      %v911 = vld [vmem:[%s190 + $0x10] sm:$0x3]
      %v918 = vunpack.c.l.b16 %v901
      %v919 = vunpack.c.l.b16 %v902
      %v920 = vunpack.c.l.b16 %v903
      %v921 = vunpack.c.l.b16 %v904
      %v922 = vunpack.c.l.b16 %v905
      %v923 = vunpack.c.l.b16 %v906
      %v924 = vpack.c.b16 %v919, %v918
      %v925 = vpack.c.b16 %v921, %v920
      %v926 = vpack.c.b16 %v923, %v922
      %v932 = vunpack.c.l.b16 %v907
      %v933 = vunpack.c.l.b16 %v908
      %v934 = vunpack.c.l.b16 %v909
      %v935 = vunpack.c.l.b16 %v910
      %v936 = vunpack.c.l.b16 %v911
      %v937 = vpack.c.b16 %v933, %v932
      %v938 = vpack.c.b16 %v935, %v934
      %v939 = vpack.c.b16 %v936, %v936
      %v943 = vsel %vm226, %v924, 0
      %v946 = vsel %vm226, %v925, 0
      %v949 = vsel %vm226, %v926, 0
      %v952 = vsel %vm236, %v939, 0
      %954 = vmatprep.subr.bf16.mxu0 0
      %955 = vmatpush1.bf16.msra.mxu0 %v937
      %956 = vmatprep.subr.bf16.mxu0 0
      %957 = vmatpush1.bf16.msra.mxu0 %v938
      %958 = vmatprep.subr.bf16.mxu0 0
      %959 = vmatpush1.bf16.msra.mxu0 %v952
      %960 = vmatprep.subr.bf16.mxu0 0
      %961 = vmatpush1.bf16.msra.mxu0 0
      %962 = vmatprep.subr.bf16.mxu0 0
      %963 = vmatpush1.bf16.msra.mxu0 0
      %964 = vmatprep.subr.bf16.mxu0 0
      %965 = vmatpush1.bf16.msra.mxu0 0
      %966 = vmatprep.subr.bf16.mxu0 0
      %967 = vmatpush1.bf16.msra.mxu0 0
      %968 = vmatprep.subr.bf16.mxu0 0
      %969 = vmatpush1.bf16.msra.mxu0 0
      %970 = vmatprep.subr.bf16.mxu0 0
      %971 = vmatpush1.bf16.msra.mxu0 0
      %972 = vmatprep.subr.bf16.mxu0 0
      %973 = vmatpush1.bf16.msra.mxu0 0
      %974 = vmatprep.subr.bf16.mxu0 0
      %975 = vmatpush1.bf16.msra.mxu0 0
      %976 = vmatprep.subr.bf16.mxu0 0
      %977 = vmatpush1.bf16.msra.mxu0 0
      %978 = vmatprep.subr.bf16.mxu0 0
      %979 = vmatpush1.bf16.msra.mxu0 0
      %980 = vmatprep.subr.bf16.mxu0 0
      %981 = vmatpush1.bf16.msra.mxu0 0
      %982 = vmatprep.subr.bf16.mxu0 0
      %983 = vmatpush1.bf16.msra.mxu0 0
      %984 = vmatprep.subr.bf16.mxu0 0
      %985 = vmatpush1.bf16.msra.mxu0 0
      %986 = vmatprep.mubr.bf16.mxu0 0
      %987 = vmatmul.mubr.bf16.gmra.mrb[0].mxu0 %v943
      %v988 = vpop.f32.mrb[0].mxu0
      %v989 = vadd.f32 0.0, %v988
      %v990 = vpop.f32.mrb[0].mxu0
      %v991 = vpop.f32.mrb[0].mxu0
      %v992 = vadd.f32 0.0, %v991
      %v993 = vpop.f32.mrb[0].mxu0
      %994 = vmatprep.mubr.bf16.mxu0 0
      %995 = vmatmul.mubr.bf16.gmra.mrb[0].mxu0 %v946
      %v996 = vpop.f32.mrb[0].mxu0
      %v997 = vadd.f32 0.0, %v996
      %v998 = vpop.f32.mrb[0].mxu0
      %v999 = vpop.f32.mrb[0].mxu0
      %v1000 = vadd.f32 0.0, %v999
      %v1001 = vpop.f32.mrb[0].mxu0
      %1002 = vmatprep.mubr.bf16.mxu0 0
      %1003 = vmatmul.mubr.bf16.gmra.mrb[0].mxu0 %v949
      %v1004 = vpop.f32.mrb[0].mxu0
      %v1005 = vadd.f32 0.0, %v1004
      %v1006 = vpop.f32.mrb[0].mxu0
      %v1007 = vpop.f32.mrb[0].mxu0
      %v1008 = vadd.f32 0.0, %v1007
      %v1009 = vpop.f32.mrb[0].mxu0
      %1010 = vdwg.mxu0
      %v1017 = vunpack.c.l.b16 %v890
      %v1018 = vunpack.c.l.b16 %v891
      %v1019 = vunpack.c.l.b16 %v892
      %v1020 = vunpack.c.l.b16 %v893
      %v1021 = vunpack.c.l.b16 %v894
      %v1022 = vunpack.c.l.b16 %v895
      %v1023 = vpack.c.b16 %v1018, %v1017
      %v1024 = vpack.c.b16 %v1020, %v1019
      %v1025 = vpack.c.b16 %v1022, %v1021
      %v1031 = vunpack.c.l.b16 %v896
      %v1032 = vunpack.c.l.b16 %v897
      %v1033 = vunpack.c.l.b16 %v898
      %v1034 = vunpack.c.l.b16 %v899
      %v1035 = vunpack.c.l.b16 %v900
      %v1036 = vpack.c.b16 %v1032, %v1031
      %v1037 = vpack.c.b16 %v1034, %v1033
      %v1038 = vpack.c.b16 %v1035, %v1035
      %v1042 = vsel %vm226, %v1023, 0
      %v1045 = vsel %vm226, %v1024, 0
      %v1048 = vsel %vm226, %v1025, 0
      %v1051 = vsel %vm236, %v1038, 0
      %1053 = vmatprep.subr.bf16.mxu0 0
      %1054 = vmatpush1.bf16.msra.mxu0 %v1036
      %1055 = vmatprep.subr.bf16.mxu0 0
      %1056 = vmatpush1.bf16.msra.mxu0 %v1037
      %1057 = vmatprep.subr.bf16.mxu0 0
      %1058 = vmatpush1.bf16.msra.mxu0 %v1051
      %1059 = vmatprep.subr.bf16.mxu0 0
      %1060 = vmatpush1.bf16.msra.mxu0 0
      %1061 = vmatprep.subr.bf16.mxu0 0
      %1062 = vmatpush1.bf16.msra.mxu0 0
      %1063 = vmatprep.subr.bf16.mxu0 0
      %1064 = vmatpush1.bf16.msra.mxu0 0
      %1065 = vmatprep.subr.bf16.mxu0 0
      %1066 = vmatpush1.bf16.msra.mxu0 0
      %1067 = vmatprep.subr.bf16.mxu0 0
      %1068 = vmatpush1.bf16.msra.mxu0 0
      %1069 = vmatprep.subr.bf16.mxu0 0
      %1070 = vmatpush1.bf16.msra.mxu0 0
      %1071 = vmatprep.subr.bf16.mxu0 0
      %1072 = vmatpush1.bf16.msra.mxu0 0
      %1073 = vmatprep.subr.bf16.mxu0 0
      %1074 = vmatpush1.bf16.msra.mxu0 0
      %1075 = vmatprep.subr.bf16.mxu0 0
      %1076 = vmatpush1.bf16.msra.mxu0 0
      %1077 = vmatprep.subr.bf16.mxu0 0
      %1078 = vmatpush1.bf16.msra.mxu0 0
      %1079 = vmatprep.subr.bf16.mxu0 0
      %1080 = vmatpush1.bf16.msra.mxu0 0
      %1081 = vmatprep.subr.bf16.mxu0 0
      %1082 = vmatpush1.bf16.msra.mxu0 0
      %1083 = vmatprep.subr.bf16.mxu0 0
      %1084 = vmatpush1.bf16.msra.mxu0 0
      %1085 = vmatprep.mubr.bf16.mxu0 0
      %1086 = vmatmul.mubr.bf16.gmra.mrb[0].mxu0 %v1042
      %v1087 = vpop.f32.mrb[0].mxu0
      %v1088 = vadd.f32 %v989, %v1087
      %v1089 = vpop.f32.mrb[0].mxu0
      %v1090 = vpop.f32.mrb[0].mxu0
      %v1091 = vadd.f32 %v992, %v1090
      %v1092 = vpop.f32.mrb[0].mxu0
      %1093 = vmatprep.mubr.bf16.mxu0 0
      %1094 = vmatmul.mubr.bf16.gmra.mrb[0].mxu0 %v1045
      %v1095 = vpop.f32.mrb[0].mxu0
      %v1096 = vadd.f32 %v997, %v1095
      %v1097 = vpop.f32.mrb[0].mxu0
      %v1098 = vpop.f32.mrb[0].mxu0
      %v1099 = vadd.f32 %v1000, %v1098
      %v1100 = vpop.f32.mrb[0].mxu0
      %1101 = vmatprep.mubr.bf16.mxu0 0
      %1102 = vmatmul.mubr.bf16.gmra.mrb[0].mxu0 %v1048
      %v1103 = vpop.f32.mrb[0].mxu0
      %v1104 = vadd.f32 %v1005, %v1103
      %v1105 = vpop.f32.mrb[0].mxu0
      %v1106 = vpop.f32.mrb[0].mxu0
      %v1107 = vadd.f32 %v1008, %v1106
      %v1108 = vpop.f32.mrb[0].mxu0
      %1109 = vdwg.mxu0
      %s1110 = scalar_lea.vmem %s165, 96
      %v1111 = vld [vmem:[%s1110] sm:$0xf]
      %v1112 = vld [vmem:[%s1110 + $0x4] sm:$0xf]
      %v1113 = vld [vmem:[%s1110 + $0x8] sm:$0xf]
      %v1114 = vld [vmem:[%s1110 + $0xc] sm:$0xf]
      %v1115 = vld [vmem:[%s1110 + $0x10] sm:$0xf]
      %v1116 = vld [vmem:[%s1110 + $0x14] sm:$0xf]
      %v1117 = vld [vmem:[%s403] sm:$0xf]
      %v1118 = vld [vmem:[%s403 + $0x4] sm:$0xf]
      %v1119 = vld [vmem:[%s403 + $0x8] sm:$0xf]
      %v1120 = vld [vmem:[%s403 + $0xc] sm:$0xf]
      %v1121 = vld [vmem:[%s403 + $0x10] sm:$0x3]
      %v1128 = vunpack.c.l.b16 %v1111
      %v1129 = vunpack.c.l.b16 %v1112
      %v1130 = vunpack.c.l.b16 %v1113
      %v1131 = vunpack.c.l.b16 %v1114
      %v1132 = vunpack.c.l.b16 %v1115
      %v1133 = vunpack.c.l.b16 %v1116
      %v1134 = vpack.c.b16 %v1129, %v1128
      %v1135 = vpack.c.b16 %v1131, %v1130
      %v1136 = vpack.c.b16 %v1133, %v1132
      %v1142 = vunpack.c.l.b16 %v1117
      %v1143 = vunpack.c.l.b16 %v1118
      %v1144 = vunpack.c.l.b16 %v1119
      %v1145 = vunpack.c.l.b16 %v1120
      %v1146 = vunpack.c.l.b16 %v1121
      %v1147 = vpack.c.b16 %v1143, %v1142
      %v1148 = vpack.c.b16 %v1145, %v1144
      %v1149 = vpack.c.b16 %v1146, %v1146
      %v1153 = vsel %vm226, %v1134, 0
      %v1156 = vsel %vm226, %v1135, 0
      %v1159 = vsel %vm226, %v1136, 0
      %v1162 = vsel %vm236, %v1149, 0
      %1164 = vmatprep.subr.bf16.mxu0 0
      %1165 = vmatpush1.bf16.msra.mxu0 %v1147
      %1166 = vmatprep.subr.bf16.mxu0 0
      %1167 = vmatpush1.bf16.msra.mxu0 %v1148
      %1168 = vmatprep.subr.bf16.mxu0 0
      %1169 = vmatpush1.bf16.msra.mxu0 %v1162
      %1170 = vmatprep.subr.bf16.mxu0 0
      %1171 = vmatpush1.bf16.msra.mxu0 0
      %1172 = vmatprep.subr.bf16.mxu0 0
      %1173 = vmatpush1.bf16.msra.mxu0 0
      %1174 = vmatprep.subr.bf16.mxu0 0
      %1175 = vmatpush1.bf16.msra.mxu0 0
      %1176 = vmatprep.subr.bf16.mxu0 0
      %1177 = vmatpush1.bf16.msra.mxu0 0
      %1178 = vmatprep.subr.bf16.mxu0 0
      %1179 = vmatpush1.bf16.msra.mxu0 0
      %1180 = vmatprep.subr.bf16.mxu0 0
      %1181 = vmatpush1.bf16.msra.mxu0 0
      %1182 = vmatprep.subr.bf16.mxu0 0
      %1183 = vmatpush1.bf16.msra.mxu0 0
      %1184 = vmatprep.subr.bf16.mxu0 0
      %1185 = vmatpush1.bf16.msra.mxu0 0
      %1186 = vmatprep.subr.bf16.mxu0 0
      %1187 = vmatpush1.bf16.msra.mxu0 0
      %1188 = vmatprep.subr.bf16.mxu0 0
      %1189 = vmatpush1.bf16.msra.mxu0 0
      %1190 = vmatprep.subr.bf16.mxu0 0
      %1191 = vmatpush1.bf16.msra.mxu0 0
      %1192 = vmatprep.subr.bf16.mxu0 0
      %1193 = vmatpush1.bf16.msra.mxu0 0
      %1194 = vmatprep.subr.bf16.mxu0 0
      %1195 = vmatpush1.bf16.msra.mxu0 0
      %1196 = vmatprep.mubr.bf16.mxu0 0
      %1197 = vmatmul.mubr.bf16.gmra.mrb[0].mxu0 %v1153
      %v1198 = vpop.f32.mrb[0].mxu0
      %v1199 = vadd.f32 0.0, %v1198
      %v1200 = vpop.f32.mrb[0].mxu0
      %v1201 = vpop.f32.mrb[0].mxu0
      %v1202 = vadd.f32 0.0, %v1201
      %v1203 = vpop.f32.mrb[0].mxu0
      %1204 = vmatprep.mubr.bf16.mxu0 0
      %1205 = vmatmul.mubr.bf16.gmra.mrb[0].mxu0 %v1156
      %v1206 = vpop.f32.mrb[0].mxu0
      %v1207 = vadd.f32 0.0, %v1206
      %v1208 = vpop.f32.mrb[0].mxu0
      %v1209 = vpop.f32.mrb[0].mxu0
      %v1210 = vadd.f32 0.0, %v1209
      %v1211 = vpop.f32.mrb[0].mxu0
      %1212 = vmatprep.mubr.bf16.mxu0 0
      %1213 = vmatmul.mubr.bf16.gmra.mrb[0].mxu0 %v1159
      %v1214 = vpop.f32.mrb[0].mxu0
      %v1215 = vadd.f32 0.0, %v1214
      %v1216 = vpop.f32.mrb[0].mxu0
      %v1217 = vpop.f32.mrb[0].mxu0
      %v1218 = vadd.f32 0.0, %v1217
      %v1219 = vpop.f32.mrb[0].mxu0
      %1220 = vdwg.mxu0
      %v1221 = vadd.f32 %v1088, %v1199
      %v1222 = vadd.f32 %v1091, %v1202
      %v1223 = vadd.f32 %v1096, %v1207
      %v1224 = vadd.f32 %v1099, %v1210
      %v1225 = vadd.f32 %v1104, %v1215
      %v1226 = vadd.f32 %v1107, %v1218
      %v1227 = vld [vmem:[%s2] sm:$0x1]
      %v1229 = vlaneseq
      %v1230 = vshrl.u32 %v1229, 7
      %v1231 = vsub.s32 0, %v1230
      %v1232 = vrot.slane %v1227, %v1231
      %v1234 = vadd.f32 %v1221, %v1232
      %v1235 = vadd.f32 %v1222, %v1232
      %v1236 = vadd.f32 %v1223, %v1232
      %v1237 = vadd.f32 %v1224, %v1232
      %v1238 = vadd.f32 %v1225, %v1232
      %v1239 = vadd.f32 %v1226, %v1232
      %s1240 = scalar_lea.vmem %s170, 96
      %1241 = vst [vmem:[%s1240] sm:$0xff] %v1234
      %1242 = vst [vmem:[%s1240 + $0x8] sm:$0xff] %v1235
      %1243 = vst [vmem:[%s1240 + $0x10] sm:$0xff] %v1236
      %1244 = vst [vmem:[%s1240 + $0x18] sm:$0xff] %v1237
      %1245 = vst [vmem:[%s1240 + $0x20] sm:$0xff] %v1238
      %1246 = vst [vmem:[%s1240 + $0x28] sm:$0xff] %v1239
      %v1247 = vld [vmem:[%s753] sm:$0xf]
      %v1248 = vld [vmem:[%s753 + $0x4] sm:$0xf]
      %v1249 = vld [vmem:[%s753 + $0x8] sm:$0xf]
      %v1250 = vld [vmem:[%s753 + $0xc] sm:$0xf]
      %v1251 = vld [vmem:[%s753 + $0x10] sm:$0xf]
      %v1252 = vld [vmem:[%s753 + $0x14] sm:$0xf]
      %v1253 = vld [vmem:[%s1] sm:$0xf]
      %v1254 = vld [vmem:[%s1 + $0x4] sm:$0xf]
      %v1255 = vld [vmem:[%s1 + $0x8] sm:$0xf]
      %v1256 = vld [vmem:[%s1 + $0xc] sm:$0xf]
      %v1257 = vld [vmem:[%s1 + $0x10] sm:$0x3]
      %v1258 = vld [vmem:[%s1110] sm:$0xf]
      %v1259 = vld [vmem:[%s1110 + $0x4] sm:$0xf]
      %v1260 = vld [vmem:[%s1110 + $0x8] sm:$0xf]
      %v1261 = vld [vmem:[%s1110 + $0xc] sm:$0xf]
      %v1262 = vld [vmem:[%s1110 + $0x10] sm:$0xf]
      %v1263 = vld [vmem:[%s1110 + $0x14] sm:$0xf]
      %v1264 = vld [vmem:[%s190] sm:$0xf]
      %v1265 = vld [vmem:[%s190 + $0x4] sm:$0xf]
      %v1266 = vld [vmem:[%s190 + $0x8] sm:$0xf]
      %v1267 = vld [vmem:[%s190 + $0xc] sm:$0xf]
      %v1268 = vld [vmem:[%s190 + $0x10] sm:$0x3]
      %v1275 = vunpack.c.l.b16 %v1258
      %v1276 = vunpack.c.l.b16 %v1259
      %v1277 = vunpack.c.l.b16 %v1260
      %v1278 = vunpack.c.l.b16 %v1261
      %v1279 = vunpack.c.l.b16 %v1262
      %v1280 = vunpack.c.l.b16 %v1263
      %v1281 = vpack.c.b16 %v1276, %v1275
      %v1282 = vpack.c.b16 %v1278, %v1277
      %v1283 = vpack.c.b16 %v1280, %v1279
      %v1289 = vunpack.c.l.b16 %v1264
      %v1290 = vunpack.c.l.b16 %v1265
      %v1291 = vunpack.c.l.b16 %v1266
      %v1292 = vunpack.c.l.b16 %v1267
      %v1293 = vunpack.c.l.b16 %v1268
      %v1294 = vpack.c.b16 %v1290, %v1289
      %v1295 = vpack.c.b16 %v1292, %v1291
      %v1296 = vpack.c.b16 %v1293, %v1293
      %v1300 = vsel %vm226, %v1281, 0
      %v1303 = vsel %vm226, %v1282, 0
      %v1306 = vsel %vm226, %v1283, 0
      %v1309 = vsel %vm236, %v1296, 0
      %1311 = vmatprep.subr.bf16.mxu0 0
      %1312 = vmatpush1.bf16.msra.mxu0 %v1294
      %1313 = vmatprep.subr.bf16.mxu0 0
      %1314 = vmatpush1.bf16.msra.mxu0 %v1295
      %1315 = vmatprep.subr.bf16.mxu0 0
      %1316 = vmatpush1.bf16.msra.mxu0 %v1309
      %1317 = vmatprep.subr.bf16.mxu0 0
      %1318 = vmatpush1.bf16.msra.mxu0 0
      %1319 = vmatprep.subr.bf16.mxu0 0
      %1320 = vmatpush1.bf16.msra.mxu0 0
      %1321 = vmatprep.subr.bf16.mxu0 0
      %1322 = vmatpush1.bf16.msra.mxu0 0
      %1323 = vmatprep.subr.bf16.mxu0 0
      %1324 = vmatpush1.bf16.msra.mxu0 0
      %1325 = vmatprep.subr.bf16.mxu0 0
      %1326 = vmatpush1.bf16.msra.mxu0 0
      %1327 = vmatprep.subr.bf16.mxu0 0
      %1328 = vmatpush1.bf16.msra.mxu0 0
      %1329 = vmatprep.subr.bf16.mxu0 0
      %1330 = vmatpush1.bf16.msra.mxu0 0
      %1331 = vmatprep.subr.bf16.mxu0 0
      %1332 = vmatpush1.bf16.msra.mxu0 0
      %1333 = vmatprep.subr.bf16.mxu0 0
      %1334 = vmatpush1.bf16.msra.mxu0 0
      %1335 = vmatprep.subr.bf16.mxu0 0
      %1336 = vmatpush1.bf16.msra.mxu0 0
      %1337 = vmatprep.subr.bf16.mxu0 0
      %1338 = vmatpush1.bf16.msra.mxu0 0
      %1339 = vmatprep.subr.bf16.mxu0 0
      %1340 = vmatpush1.bf16.msra.mxu0 0
      %1341 = vmatprep.subr.bf16.mxu0 0
      %1342 = vmatpush1.bf16.msra.mxu0 0
      %1343 = vmatprep.mubr.bf16.mxu0 0
      %1344 = vmatmul.mubr.bf16.gmra.mrb[0].mxu0 %v1300
      %v1345 = vpop.f32.mrb[0].mxu0
      %v1346 = vadd.f32 0.0, %v1345
      %v1347 = vpop.f32.mrb[0].mxu0
      %v1348 = vpop.f32.mrb[0].mxu0
      %v1349 = vadd.f32 0.0, %v1348
      %v1350 = vpop.f32.mrb[0].mxu0
      %1351 = vmatprep.mubr.bf16.mxu0 0
      %1352 = vmatmul.mubr.bf16.gmra.mrb[0].mxu0 %v1303
      %v1353 = vpop.f32.mrb[0].mxu0
      %v1354 = vadd.f32 0.0, %v1353
      %v1355 = vpop.f32.mrb[0].mxu0
      %v1356 = vpop.f32.mrb[0].mxu0
      %v1357 = vadd.f32 0.0, %v1356
      %v1358 = vpop.f32.mrb[0].mxu0
      %1359 = vmatprep.mubr.bf16.mxu0 0
      %1360 = vmatmul.mubr.bf16.gmra.mrb[0].mxu0 %v1306
      %v1361 = vpop.f32.mrb[0].mxu0
      %v1362 = vadd.f32 0.0, %v1361
      %v1363 = vpop.f32.mrb[0].mxu0
      %v1364 = vpop.f32.mrb[0].mxu0
      %v1365 = vadd.f32 0.0, %v1364
      %v1366 = vpop.f32.mrb[0].mxu0
      %1367 = vdwg.mxu0
      %v1374 = vunpack.c.l.b16 %v1247
      %v1375 = vunpack.c.l.b16 %v1248
      %v1376 = vunpack.c.l.b16 %v1249
      %v1377 = vunpack.c.l.b16 %v1250
      %v1378 = vunpack.c.l.b16 %v1251
      %v1379 = vunpack.c.l.b16 %v1252
      %v1380 = vpack.c.b16 %v1375, %v1374
      %v1381 = vpack.c.b16 %v1377, %v1376
      %v1382 = vpack.c.b16 %v1379, %v1378
      %v1388 = vunpack.c.l.b16 %v1253
      %v1389 = vunpack.c.l.b16 %v1254
      %v1390 = vunpack.c.l.b16 %v1255
      %v1391 = vunpack.c.l.b16 %v1256
      %v1392 = vunpack.c.l.b16 %v1257
      %v1393 = vpack.c.b16 %v1389, %v1388
      %v1394 = vpack.c.b16 %v1391, %v1390
      %v1395 = vpack.c.b16 %v1392, %v1392
      %v1399 = vsel %vm226, %v1380, 0
      %v1402 = vsel %vm226, %v1381, 0
      %v1405 = vsel %vm226, %v1382, 0
      %v1408 = vsel %vm236, %v1395, 0
      %1410 = vmatprep.subr.bf16.mxu0 0
      %1411 = vmatpush1.bf16.msra.mxu0 %v1393
      %1412 = vmatprep.subr.bf16.mxu0 0
      %1413 = vmatpush1.bf16.msra.mxu0 %v1394
      %1414 = vmatprep.subr.bf16.mxu0 0
      %1415 = vmatpush1.bf16.msra.mxu0 %v1408
      %1416 = vmatprep.subr.bf16.mxu0 0
      %1417 = vmatpush1.bf16.msra.mxu0 0
      %1418 = vmatprep.subr.bf16.mxu0 0
      %1419 = vmatpush1.bf16.msra.mxu0 0
      %1420 = vmatprep.subr.bf16.mxu0 0
      %1421 = vmatpush1.bf16.msra.mxu0 0
      %1422 = vmatprep.subr.bf16.mxu0 0
      %1423 = vmatpush1.bf16.msra.mxu0 0
      %1424 = vmatprep.subr.bf16.mxu0 0
      %1425 = vmatpush1.bf16.msra.mxu0 0
      %1426 = vmatprep.subr.bf16.mxu0 0
      %1427 = vmatpush1.bf16.msra.mxu0 0
      %1428 = vmatprep.subr.bf16.mxu0 0
      %1429 = vmatpush1.bf16.msra.mxu0 0
      %1430 = vmatprep.subr.bf16.mxu0 0
      %1431 = vmatpush1.bf16.msra.mxu0 0
      %1432 = vmatprep.subr.bf16.mxu0 0
      %1433 = vmatpush1.bf16.msra.mxu0 0
      %1434 = vmatprep.subr.bf16.mxu0 0
      %1435 = vmatpush1.bf16.msra.mxu0 0
      %1436 = vmatprep.subr.bf16.mxu0 0
      %1437 = vmatpush1.bf16.msra.mxu0 0
      %1438 = vmatprep.subr.bf16.mxu0 0
      %1439 = vmatpush1.bf16.msra.mxu0 0
      %1440 = vmatprep.subr.bf16.mxu0 0
      %1441 = vmatpush1.bf16.msra.mxu0 0
      %1442 = vmatprep.mubr.bf16.mxu0 0
      %1443 = vmatmul.mubr.bf16.gmra.mrb[0].mxu0 %v1399
      %v1444 = vpop.f32.mrb[0].mxu0
      %v1445 = vadd.f32 %v1346, %v1444
      %v1446 = vpop.f32.mrb[0].mxu0
      %v1447 = vpop.f32.mrb[0].mxu0
      %v1448 = vadd.f32 %v1349, %v1447
      %v1449 = vpop.f32.mrb[0].mxu0
      %1450 = vmatprep.mubr.bf16.mxu0 0
      %1451 = vmatmul.mubr.bf16.gmra.mrb[0].mxu0 %v1402
      %v1452 = vpop.f32.mrb[0].mxu0
      %v1453 = vadd.f32 %v1354, %v1452
      %v1454 = vpop.f32.mrb[0].mxu0
      %v1455 = vpop.f32.mrb[0].mxu0
      %v1456 = vadd.f32 %v1357, %v1455
      %v1457 = vpop.f32.mrb[0].mxu0
      %1458 = vmatprep.mubr.bf16.mxu0 0
      %1459 = vmatmul.mubr.bf16.gmra.mrb[0].mxu0 %v1405
      %v1460 = vpop.f32.mrb[0].mxu0
      %v1461 = vadd.f32 %v1362, %v1460
      %v1462 = vpop.f32.mrb[0].mxu0
      %v1463 = vpop.f32.mrb[0].mxu0
      %v1464 = vadd.f32 %v1365, %v1463
      %v1465 = vpop.f32.mrb[0].mxu0
      %1466 = vdwg.mxu0
      %s1467 = scalar_lea.vmem %s165, 120
      %v1468 = vld [vmem:[%s1467] sm:$0xf]
      %v1469 = vld [vmem:[%s1467 + $0x4] sm:$0xf]
      %v1470 = vld [vmem:[%s1467 + $0x8] sm:$0xf]
      %v1471 = vld [vmem:[%s1467 + $0xc] sm:$0xf]
      %v1472 = vld [vmem:[%s1467 + $0x10] sm:$0xf]
      %v1473 = vld [vmem:[%s1467 + $0x14] sm:$0xf]
      %v1474 = vld [vmem:[%s403] sm:$0xf]
      %v1475 = vld [vmem:[%s403 + $0x4] sm:$0xf]
      %v1476 = vld [vmem:[%s403 + $0x8] sm:$0xf]
      %v1477 = vld [vmem:[%s403 + $0xc] sm:$0xf]
      %v1478 = vld [vmem:[%s403 + $0x10] sm:$0x3]
      %v1485 = vunpack.c.l.b16 %v1468
      %v1486 = vunpack.c.l.b16 %v1469
      %v1487 = vunpack.c.l.b16 %v1470
      %v1488 = vunpack.c.l.b16 %v1471
      %v1489 = vunpack.c.l.b16 %v1472
      %v1490 = vunpack.c.l.b16 %v1473
      %v1491 = vpack.c.b16 %v1486, %v1485
      %v1492 = vpack.c.b16 %v1488, %v1487
      %v1493 = vpack.c.b16 %v1490, %v1489
      %v1499 = vunpack.c.l.b16 %v1474
      %v1500 = vunpack.c.l.b16 %v1475
      %v1501 = vunpack.c.l.b16 %v1476
      %v1502 = vunpack.c.l.b16 %v1477
      %v1503 = vunpack.c.l.b16 %v1478
      %v1504 = vpack.c.b16 %v1500, %v1499
      %v1505 = vpack.c.b16 %v1502, %v1501
      %v1506 = vpack.c.b16 %v1503, %v1503
      %v1510 = vsel %vm226, %v1491, 0
      %v1513 = vsel %vm226, %v1492, 0
      %v1516 = vsel %vm226, %v1493, 0
      %v1519 = vsel %vm236, %v1506, 0
      %1521 = vmatprep.subr.bf16.mxu0 0
      %1522 = vmatpush1.bf16.msra.mxu0 %v1504
      %1523 = vmatprep.subr.bf16.mxu0 0
      %1524 = vmatpush1.bf16.msra.mxu0 %v1505
      %1525 = vmatprep.subr.bf16.mxu0 0
      %1526 = vmatpush1.bf16.msra.mxu0 %v1519
      %1527 = vmatprep.subr.bf16.mxu0 0
      %1528 = vmatpush1.bf16.msra.mxu0 0
      %1529 = vmatprep.subr.bf16.mxu0 0
      %1530 = vmatpush1.bf16.msra.mxu0 0
      %1531 = vmatprep.subr.bf16.mxu0 0
      %1532 = vmatpush1.bf16.msra.mxu0 0
      %1533 = vmatprep.subr.bf16.mxu0 0
      %1534 = vmatpush1.bf16.msra.mxu0 0
      %1535 = vmatprep.subr.bf16.mxu0 0
      %1536 = vmatpush1.bf16.msra.mxu0 0
      %1537 = vmatprep.subr.bf16.mxu0 0
      %1538 = vmatpush1.bf16.msra.mxu0 0
      %1539 = vmatprep.subr.bf16.mxu0 0
      %1540 = vmatpush1.bf16.msra.mxu0 0
      %1541 = vmatprep.subr.bf16.mxu0 0
      %1542 = vmatpush1.bf16.msra.mxu0 0
      %1543 = vmatprep.subr.bf16.mxu0 0
      %1544 = vmatpush1.bf16.msra.mxu0 0
      %1545 = vmatprep.subr.bf16.mxu0 0
      %1546 = vmatpush1.bf16.msra.mxu0 0
      %1547 = vmatprep.subr.bf16.mxu0 0
      %1548 = vmatpush1.bf16.msra.mxu0 0
      %1549 = vmatprep.subr.bf16.mxu0 0
      %1550 = vmatpush1.bf16.msra.mxu0 0
      %1551 = vmatprep.subr.bf16.mxu0 0
      %1552 = vmatpush1.bf16.msra.mxu0 0
      %1553 = vmatprep.mubr.bf16.mxu0 0
      %1554 = vmatmul.mubr.bf16.gmra.mrb[0].mxu0 %v1510
      %v1555 = vpop.f32.mrb[0].mxu0
      %v1556 = vadd.f32 0.0, %v1555
      %v1557 = vpop.f32.mrb[0].mxu0
      %v1558 = vpop.f32.mrb[0].mxu0
      %v1559 = vadd.f32 0.0, %v1558
      %v1560 = vpop.f32.mrb[0].mxu0
      %1561 = vmatprep.mubr.bf16.mxu0 0
      %1562 = vmatmul.mubr.bf16.gmra.mrb[0].mxu0 %v1513
      %v1563 = vpop.f32.mrb[0].mxu0
      %v1564 = vadd.f32 0.0, %v1563
      %v1565 = vpop.f32.mrb[0].mxu0
      %v1566 = vpop.f32.mrb[0].mxu0
      %v1567 = vadd.f32 0.0, %v1566
      %v1568 = vpop.f32.mrb[0].mxu0
      %1569 = vmatprep.mubr.bf16.mxu0 0
      %1570 = vmatmul.mubr.bf16.gmra.mrb[0].mxu0 %v1516
      %v1571 = vpop.f32.mrb[0].mxu0
      %v1572 = vadd.f32 0.0, %v1571
      %v1573 = vpop.f32.mrb[0].mxu0
      %v1574 = vpop.f32.mrb[0].mxu0
      %v1575 = vadd.f32 0.0, %v1574
      %v1576 = vpop.f32.mrb[0].mxu0
      %1577 = vdwg.mxu0
      %v1578 = vadd.f32 %v1445, %v1556
      %v1579 = vadd.f32 %v1448, %v1559
      %v1580 = vadd.f32 %v1453, %v1564
      %v1581 = vadd.f32 %v1456, %v1567
      %v1582 = vadd.f32 %v1461, %v1572
      %v1583 = vadd.f32 %v1464, %v1575
      %v1584 = vld [vmem:[%s2] sm:$0x1]
      %v1586 = vlaneseq
      %v1587 = vshrl.u32 %v1586, 7
      %v1588 = vsub.s32 0, %v1587
      %v1589 = vrot.slane %v1584, %v1588
      %v1591 = vadd.f32 %v1578, %v1589
      %v1592 = vadd.f32 %v1579, %v1589
      %v1593 = vadd.f32 %v1580, %v1589
      %v1594 = vadd.f32 %v1581, %v1589
      %v1595 = vadd.f32 %v1582, %v1589
      %v1596 = vadd.f32 %v1583, %v1589
      %s1597 = scalar_lea.vmem %s170, 144
      %1598 = vst [vmem:[%s1597] sm:$0xff] %v1591
      %1599 = vst [vmem:[%s1597 + $0x8] sm:$0xff] %v1592
      %1600 = vst [vmem:[%s1597 + $0x10] sm:$0xff] %v1593
      %1601 = vst [vmem:[%s1597 + $0x18] sm:$0xff] %v1594
      %1602 = vst [vmem:[%s1597 + $0x20] sm:$0xff] %v1595
      %1603 = vst [vmem:[%s1597 + $0x28] sm:$0xff] %v1596
      %p1604 = scmp.lt.s32.totalorder %s14, 1
      %s1605 = scalar_select %p1604, %s14, 1
      %s1606 = smul.addr %s1605, 24
      %s1607 = smul.addr %s1606, 8
      %s1608 = scalar_lea.vmem %s3, %s1607
      // Predicated region
      $region33: #{deconv_subpixel_apply.1} parent=31 // pred_check
        %p1609 = pneg %p100
      $region34: #{deconv_subpixel_apply.1} parent=31 // pred_check_branch
        %1611 = sbr.rel (%p1609) target = $region36
      $region35: #{deconv_subpixel_apply.1} parent=31 // pred_region
        _
      $region36: #{deconv_subpixel_apply.1} parent=31 // pred_fallthru
        _
    $region32: #{deconv_subpixel_apply.1} parent=5 // pred_fallthru
      _
    %p1612 = scmp.le.s32.totalorder 2, %s9
    // Predicated region
    $region37: #{deconv_subpixel_apply.1} parent=5 // pred_check
      %p1613 = pneg %p1612
    $region38: #{deconv_subpixel_apply.1} parent=5 // pred_check_branch
      %1615 = sbr.rel (%p1613) target = $region40
    $region39: #{deconv_subpixel_apply.1} parent=5 // pred_region
      %s1616 = ssub.s32 %s9, 2
      // Predicated region
      $region41: #{deconv_subpixel_apply.1} parent=39 // pred_check
        %p1617 = pneg %p106
      $region42: #{deconv_subpixel_apply.1} parent=39 // pred_check_branch
        %1619 = sbr.rel (%p1617) target = $region44
      $region43: #{deconv_subpixel_apply.1} parent=39 // pred_region
        %p1620 = scmp.lt.s32.totalorder %s15, 1
        %s1621 = scalar_select %p1620, %s15, 1
        %s1622 = smul.addr %s1621, 24
        %s1623 = smul.addr %s1622, 8
        %s1624 = scalar_lea.vmem %s3, %s1623
      $region44: #{deconv_subpixel_apply.1} parent=39 // pred_fallthru
        _
    $region40: #{deconv_subpixel_apply.1} parent=5 // pred_fallthru
      _
  $region6: #{deconv_subpixel_apply.1} parent=0 // loop_footer
    %s13 = sadd.s32 1, %s9
  $region7: #{deconv_subpixel_apply.1} parent=0 // loop_footer_branch
    %8 = sbr.rel target = $region3
  $region8: #{deconv_subpixel_apply.1} parent=0 // loop_exit
    _

</llo_original>
